<compile_context>
chip_gen: v7x
topology: tpu7x:2x2x1
jax: 0.10.0
libtpu: 0.0.40
codegen_flags: <defaults>
</compile_context>

<pallas_src>
import functools

import jax
import jax.numpy as jnp
from jax.experimental import pallas as pl
from jax.experimental.pallas import tpu as pltpu

OUT_PAD = 128  # lane-dense padded fc2 output width


def lstm_fc_kernel(len_ref, x2d_ref, wih_ref, whh_ref, b_ref,
                   w1_ref, b1_ref, w2_ref, b2_ref,
                   out_ref,
                   xp_scr,
                   *, B, H, T):
    # ---- prologue: hoist the input projection out of the recurrence ----
    # (T*B, E) @ (E, 4H) + (1, 4H)  ->  (T*B, 4H), a single MXU push.
    xp_scr[...] = (jnp.dot(x2d_ref[...], wih_ref[...],
                           preferred_element_type=jnp.float32)
                   + b_ref[...])

    lens = len_ref[...]                              # (B, 1) int32, loaded once
    whh = whh_ref[...]                               # (H, 4H), loop-invariant

    def cell(gates, h, c, t):
        # full-tile transcendentals (EUP) on the (B, 4H) vreg, slice afterwards
        sg = jax.nn.sigmoid(gates)
        tg = jnp.tanh(gates)
        i_g = sg[:, 0 * H:1 * H]
        f_g = sg[:, 1 * H:2 * H]
        g_g = tg[:, 2 * H:3 * H]
        o_g = sg[:, 3 * H:4 * H]
        c_new = f_g * c + i_g * g_g
        h_new = o_g * jnp.tanh(c_new)
        # packed-sequence semantics: only advance state while t < length[b]
        mask = t < lens                              # (B, 1) bool
        return jnp.where(mask, h_new, h), jnp.where(mask, c_new, c)

    # ---- peel t = 0: h0 = c0 = 0 -> gates are exactly xp[0:B] ----
    zeros = jnp.zeros((B, H), jnp.float32)
    h, c = cell(xp_scr[pl.ds(0, B), :], zeros, zeros, 0)

    def body(t, carry):
        h, c = carry                                 # (B, H) each, kept in vregs
        start = pl.multiple_of(t * B, B)             # B=8 -> sublane aligned
        gates = xp_scr[pl.ds(start, B), :] + jnp.dot(
            h, whh, preferred_element_type=jnp.float32)
        return cell(gates, h, c, t)

    # static trip count, fully unrolled: the per-step mask makes iterations
    # past each sequence's length exact no-ops, so results are unchanged.
    h_fin, _ = jax.lax.fori_loop(1, T, body, (h, c), unroll=True)

    # ---- epilogue: dropout(identity) -> fc1 -> ReLU -> fc2 (lane-dense) ----
    z = jnp.maximum(
        jnp.dot(h_fin, w1_ref[...], preferred_element_type=jnp.float32)
        + b1_ref[...], 0.0)                          # (B, 32)
    out_ref[...] = (jnp.dot(z, w2_ref[...], preferred_element_type=jnp.float32)
                    + b2_ref[...])                   # (B, 128) unmasked store


def rnn_forward(x, lengths, params, output_dim):
    """x: (B, T, E) float32 (batch_first, like PyTorch), lengths: (B,) int."""
    B, T, E = x.shape
    H = params["whh"].shape[0]

    # time-major, flattened to (T*B, E) so the prologue is a single matmul
    x2d = jnp.transpose(x, (1, 0, 2)).reshape(T * B, E).astype(jnp.float32)
    lens = lengths.astype(jnp.int32).reshape(B, 1)

    kernel = functools.partial(lstm_fc_kernel, B=B, H=H, T=T)

    grid_spec = pltpu.PrefetchScalarGridSpec(
        num_scalar_prefetch=0,
        grid=(1,),
        in_specs=[
            pl.BlockSpec((B, 1), lambda i: (0, 0)),          # lengths (VMEM)
            pl.BlockSpec((T * B, E), lambda i: (0, 0)),      # x flattened
            pl.BlockSpec((E, 4 * H), lambda i: (0, 0)),      # W_ih^T
            pl.BlockSpec((H, 4 * H), lambda i: (0, 0)),      # W_hh^T
            pl.BlockSpec((1, 4 * H), lambda i: (0, 0)),      # b_ih + b_hh
            pl.BlockSpec((H, 32), lambda i: (0, 0)),         # fc1 W^T
            pl.BlockSpec((1, 32), lambda i: (0, 0)),         # fc1 b
            pl.BlockSpec((32, OUT_PAD), lambda i: (0, 0)),   # fc2 W^T (padded)
            pl.BlockSpec((1, OUT_PAD), lambda i: (0, 0)),    # fc2 b (padded)
        ],
        out_specs=pl.BlockSpec((B, OUT_PAD), lambda i: (0, 0)),
        scratch_shapes=[pltpu.VMEM((T * B, 4 * H), jnp.float32)],  # x_proj
    )

    out_pad = pl.pallas_call(
        kernel,
        out_shape=jax.ShapeDtypeStruct((B, OUT_PAD), jnp.float32),
        grid_spec=grid_spec,
        compiler_params=pltpu.CompilerParams(
            dimension_semantics=("arbitrary",)),
    )(lens, x2d, params["wih"], params["whh"], params["b"],
      params["w1"], params["b1"], params["w2"], params["b2"])

    return out_pad[:, :output_dim]


def rnn_forward_ref(x, lengths, params, output_dim):
    """Pure-JAX reference (lax.scan) for correctness checking."""
    B, T, E = x.shape
    H = params["whh"].shape[0]

    def step(carry, inp):
        h, c = carry
        xt, t = inp
        gates = xt @ params["wih"] + h @ params["whh"] + params["b"]
        i = jax.nn.sigmoid(gates[:, :H])
        f = jax.nn.sigmoid(gates[:, H:2 * H])
        g = jnp.tanh(gates[:, 2 * H:3 * H])
        o = jax.nn.sigmoid(gates[:, 3 * H:])
        cn = f * c + i * g
        hn = o * jnp.tanh(cn)
        m = (t < lengths)[:, None]
        return (jnp.where(m, hn, h), jnp.where(m, cn, c)), None

    (h, _), _ = jax.lax.scan(
        step,
        (jnp.zeros((B, H), jnp.float32), jnp.zeros((B, H), jnp.float32)),
        (jnp.transpose(x, (1, 0, 2)), jnp.arange(T)))
    z = jnp.maximum(h @ params["w1"] + params["b1"], 0.0)
    # params["w2"]/["b2"] are stored lane-padded; extra columns are zeros.
    return (z @ params["w2"] + params["b2"])[:, :output_dim]


def init_params(key, embedding_dim, hidden_dim, output_dim):
    E, H, O = embedding_dim, hidden_dim, output_dim
    ks = jax.random.split(key, 8)
    s_lstm = 1.0 / jnp.sqrt(H)
    s_fc1 = 1.0 / jnp.sqrt(H)
    s_fc2 = 1.0 / jnp.sqrt(32)
    u = lambda k, shp, s: jax.random.uniform(k, shp, jnp.float32, -s, s)
    # fc2 is pre-padded to 128 lanes ONCE here (stored padded) so the kernel's
    # final store is an unmasked full-vreg vst and no per-call pads are needed.
    w2 = u(ks[6], (32, O), s_fc2)
    b2 = u(ks[7], (1, O), s_fc2)
    w2_pad = jnp.zeros((32, OUT_PAD), jnp.float32).at[:, :O].set(w2)
    b2_pad = jnp.zeros((1, OUT_PAD), jnp.float32).at[:, :O].set(b2)
    return {
        "wih": u(ks[0], (E, 4 * H), s_lstm),     # torch W_ih (4H,E) transposed
        "whh": u(ks[1], (H, 4 * H), s_lstm),     # torch W_hh (4H,H) transposed
        "b":   u(ks[2], (1, 4 * H), s_lstm) + u(ks[3], (1, 4 * H), s_lstm),
        "w1":  u(ks[4], (H, 32), s_fc1),
        "b1":  u(ks[5], (1, 32), s_fc1),
        "w2":  w2_pad,
        "b2":  b2_pad,
    }


if __name__ == "__main__":
    B, T, E, H, O = 8, 12, 16, 32, 3

    key = jax.random.PRNGKey(0)
    k_x, k_len, k_p = jax.random.split(key, 3)

    x = jax.random.normal(k_x, (B, T, E), dtype=jnp.float32)
    lengths = jax.random.randint(k_len, (B,), 1, T + 1)
    # zero out padding past each length (as pad_sequence would produce)
    pad_mask = (jnp.arange(T)[None, :] < lengths[:, None])[:, :, None]
    x = x * pad_mask.astype(x.dtype)

    params = init_params(k_p, E, H, O)

    out = rnn_forward(x, lengths, params, O)
    out = jax.block_until_ready(out)

    ref = rnn_forward_ref(x, lengths, params, O)
    assert out.shape == (B, O)
    assert jnp.allclose(out, ref, atol=2e-3, rtol=2e-3), "mismatch vs reference"

    print("KERNEL_OK")
</pallas_src>

<mosaic_0001>
module attributes {stable_mosaic.version = 11 : i64} {
  func.func @lstm_fc_kernel(%arg0: i32, %arg1: memref<8x1xi32, #tpu.memory_space<vmem>>, %arg2: memref<96x16xf32, #tpu.memory_space<vmem>>, %arg3: memref<16x128xf32, #tpu.memory_space<vmem>>, %arg4: memref<32x128xf32, #tpu.memory_space<vmem>>, %arg5: memref<1x128xf32, #tpu.memory_space<vmem>>, %arg6: memref<32x32xf32, #tpu.memory_space<vmem>>, %arg7: memref<1x32xf32, #tpu.memory_space<vmem>>, %arg8: memref<32x128xf32, #tpu.memory_space<vmem>>, %arg9: memref<1x128xf32, #tpu.memory_space<vmem>>, %arg10: memref<8x128xf32, #tpu.memory_space<vmem>>, %arg11: memref<96x128xf32, #tpu.memory_space<vmem>>) attributes {dimension_semantics = [#tpu.dimension_semantics<arbitrary>], iteration_bounds = array<i64: 1>, scalar_prefetch = 0 : i64, scratch_operands = 1 : i64, tpu.core_type = #tpu.core_type<tc>, window_params = [{pipeline_mode = #tpu.pipeline_mode<synchronous>, transform_indices = @transform_0, window_bounds = array<i64: 8, 1>}, {pipeline_mode = #tpu.pipeline_mode<synchronous>, transform_indices = @transform_1, window_bounds = array<i64: 96, 16>}, {pipeline_mode = #tpu.pipeline_mode<synchronous>, transform_indices = @transform_2, window_bounds = array<i64: 16, 128>}, {pipeline_mode = #tpu.pipeline_mode<synchronous>, transform_indices = @transform_3, window_bounds = array<i64: 32, 128>}, {pipeline_mode = #tpu.pipeline_mode<synchronous>, transform_indices = @transform_4, window_bounds = array<i64: 1, 128>}, {pipeline_mode = #tpu.pipeline_mode<synchronous>, transform_indices = @transform_5, window_bounds = array<i64: 32, 32>}, {pipeline_mode = #tpu.pipeline_mode<synchronous>, transform_indices = @transform_6, window_bounds = array<i64: 1, 32>}, {pipeline_mode = #tpu.pipeline_mode<synchronous>, transform_indices = @transform_7, window_bounds = array<i64: 32, 128>}, {pipeline_mode = #tpu.pipeline_mode<synchronous>, transform_indices = @transform_8, window_bounds = array<i64: 1, 128>}, {pipeline_mode = #tpu.pipeline_mode<synchronous>, transform_indices = @transform_9, window_bounds = array<i64: 8, 128>}]} {
    %c0 = arith.constant 0 : index
    %c0_0 = arith.constant 0 : index
    %0 = vector.load %arg2[%c0, %c0_0] : memref<96x16xf32, #tpu.memory_space<vmem>>, vector<96x16xf32>
    %c0_1 = arith.constant 0 : index
    %c0_2 = arith.constant 0 : index
    %1 = vector.load %arg3[%c0_1, %c0_2] : memref<16x128xf32, #tpu.memory_space<vmem>>, vector<16x128xf32>
    %cst = arith.constant dense<0.000000e+00> : vector<96x128xf32>
    %2 = tpu.matmul %0, %1, %cst {dimension_numbers = #tpu.dot_dimension_numbers<[1], [0], [0], [1], [0, 0, 1, 1], [], []>} : vector<96x16xf32>, vector<16x128xf32>, vector<96x128xf32> -> vector<96x128xf32>
    %c0_3 = arith.constant 0 : index
    %c0_4 = arith.constant 0 : index
    %3 = vector.load %arg5[%c0_3, %c0_4] : memref<1x128xf32, #tpu.memory_space<vmem>>, vector<1x128xf32>
    %4 = vector.broadcast %3 : vector<1x128xf32> to vector<96x128xf32>
    %5 = arith.addf %2, %4 : vector<96x128xf32>
    %c0_5 = arith.constant 0 : index
    %c0_6 = arith.constant 0 : index
    %6 = vector.load %arg11[%c0_5, %c0_6] : memref<96x128xf32, #tpu.memory_space<vmem>>, vector<96x128xf32>
    tpu.vector_store %arg11[%c0_5, %c0_6], %5 {strides = array<i32>} : memref<96x128xf32, #tpu.memory_space<vmem>>, vector<96x128xf32>,
    %c0_7 = arith.constant 0 : index
    %c0_8 = arith.constant 0 : index
    %7 = vector.load %arg1[%c0_7, %c0_8] : memref<8x1xi32, #tpu.memory_space<vmem>>, vector<8x1xi32>
    %c0_9 = arith.constant 0 : index
    %c0_10 = arith.constant 0 : index
    %8 = vector.load %arg4[%c0_9, %c0_10] : memref<32x128xf32, #tpu.memory_space<vmem>>, vector<32x128xf32>
    %cst_11 = arith.constant 0.000000e+00 : f32
    %9 = vector.broadcast %cst_11 : f32 to vector<8x32xf32>
    %c0_12 = arith.constant 0 : index
    %c0_13 = arith.constant 0 : index
    %10 = vector.load %arg11[%c0_12, %c0_13] : memref<96x128xf32, #tpu.memory_space<vmem>>, vector<8x128xf32>
    %11 = arith.negf %10 : vector<8x128xf32>
    %12 = math.exp %11 : vector<8x128xf32>
    %cst_14 = arith.constant 1.000000e+00 : f32
    %13 = vector.broadcast %cst_14 : f32 to vector<8x128xf32>
    %14 = arith.addf %13, %12 : vector<8x128xf32>
    %15 = arith.divf %13, %14 : vector<8x128xf32>
    %16 = math.tanh %10 : vector<8x128xf32>
    %17 = vector.extract_strided_slice %15 {offsets = [0, 0], sizes = [8, 32], strides = [1, 1]} : vector<8x128xf32> to vector<8x32xf32>
    %18 = vector.extract_strided_slice %15 {offsets = [0, 32], sizes = [8, 32], strides = [1, 1]} : vector<8x128xf32> to vector<8x32xf32>
    %19 = vector.extract_strided_slice %16 {offsets = [0, 64], sizes = [8, 32], strides = [1, 1]} : vector<8x128xf32> to vector<8x32xf32>
    %20 = vector.extract_strided_slice %15 {offsets = [0, 96], sizes = [8, 32], strides = [1, 1]} : vector<8x128xf32> to vector<8x32xf32>
    %21 = arith.mulf %18, %9 : vector<8x32xf32>
    %22 = arith.mulf %17, %19 : vector<8x32xf32>
    %23 = arith.addf %21, %22 : vector<8x32xf32>
    %24 = math.tanh %23 : vector<8x32xf32>
    %25 = arith.mulf %20, %24 : vector<8x32xf32>
    %c0_i32 = arith.constant 0 : i32
    %26 = vector.broadcast %c0_i32 : i32 to vector<8x1xi32>
    %27 = arith.cmpi sgt, %7, %26 : vector<8x1xi32>
    %28 = vector.shape_cast %27 : vector<8x1xi1> to vector<8x1xi1>
    %29 = vector.broadcast %28 : vector<8x1xi1> to vector<8x32xi1>
    %30 = arith.select %29, %25, %9 : vector<8x32xi1>, vector<8x32xf32>
    %31 = vector.shape_cast %27 : vector<8x1xi1> to vector<8x1xi1>
    %32 = vector.broadcast %31 : vector<8x1xi1> to vector<8x32xi1>
    %33 = arith.select %32, %23, %9 : vector<8x32xi1>, vector<8x32xf32>
    %c1_i32 = arith.constant 1 : i32
    %c8_i32 = arith.constant 8 : i32
    %34 = arith.muli %c1_i32, %c8_i32 : i32
    %35 = tpu.assume_multiple %34, 8 : i32
    %36 = arith.index_cast %35 : i32 to index
    %c0_15 = arith.constant 0 : index
    %37 = vector.load %arg11[%36, %c0_15] : memref<96x128xf32, #tpu.memory_space<vmem>>, vector<8x128xf32>
    %cst_16 = arith.constant dense<0.000000e+00> : vector<8x128xf32>
    %38 = tpu.matmul %30, %8, %cst_16 {dimension_numbers = #tpu.dot_dimension_numbers<[1], [0], [0], [1], [0, 0, 1, 1], [], []>} : vector<8x32xf32>, vector<32x128xf32>, vector<8x128xf32> -> vector<8x128xf32>
    %39 = arith.addf %37, %38 : vector<8x128xf32>
    %40 = arith.negf %39 : vector<8x128xf32>
    %41 = math.exp %40 : vector<8x128xf32>
    %cst_17 = arith.constant 1.000000e+00 : f32
    %42 = vector.broadcast %cst_17 : f32 to vector<8x128xf32>
    %43 = arith.addf %42, %41 : vector<8x128xf32>
    %44 = arith.divf %42, %43 : vector<8x128xf32>
    %45 = math.tanh %39 : vector<8x128xf32>
    %46 = vector.extract_strided_slice %44 {offsets = [0, 0], sizes = [8, 32], strides = [1, 1]} : vector<8x128xf32> to vector<8x32xf32>
    %47 = vector.extract_strided_slice %44 {offsets = [0, 32], sizes = [8, 32], strides = [1, 1]} : vector<8x128xf32> to vector<8x32xf32>
    %48 = vector.extract_strided_slice %45 {offsets = [0, 64], sizes = [8, 32], strides = [1, 1]} : vector<8x128xf32> to vector<8x32xf32>
    %49 = vector.extract_strided_slice %44 {offsets = [0, 96], sizes = [8, 32], strides = [1, 1]} : vector<8x128xf32> to vector<8x32xf32>
    %50 = arith.mulf %47, %33 : vector<8x32xf32>
    %51 = arith.mulf %46, %48 : vector<8x32xf32>
    %52 = arith.addf %50, %51 : vector<8x32xf32>
    %53 = math.tanh %52 : vector<8x32xf32>
    %54 = arith.mulf %49, %53 : vector<8x32xf32>
    %55 = vector.broadcast %c1_i32 : i32 to vector<8x1xi32>
    %56 = arith.cmpi slt, %55, %7 : vector<8x1xi32>
    %57 = vector.shape_cast %56 : vector<8x1xi1> to vector<8x1xi1>
    %58 = vector.broadcast %57 : vector<8x1xi1> to vector<8x32xi1>
    %59 = arith.select %58, %54, %30 : vector<8x32xi1>, vector<8x32xf32>
    %60 = vector.shape_cast %56 : vector<8x1xi1> to vector<8x1xi1>
    %61 = vector.broadcast %60 : vector<8x1xi1> to vector<8x32xi1>
    %62 = arith.select %61, %52, %33 : vector<8x32xi1>, vector<8x32xf32>
    %c2_i32 = arith.constant 2 : i32
    %c8_i32_18 = arith.constant 8 : i32
    %63 = arith.muli %c2_i32, %c8_i32_18 : i32
    %64 = tpu.assume_multiple %63, 8 : i32
    %65 = arith.index_cast %64 : i32 to index
    %c0_19 = arith.constant 0 : index
    %66 = vector.load %arg11[%65, %c0_19] : memref<96x128xf32, #tpu.memory_space<vmem>>, vector<8x128xf32>
    %cst_20 = arith.constant dense<0.000000e+00> : vector<8x128xf32>
    %67 = tpu.matmul %59, %8, %cst_20 {dimension_numbers = #tpu.dot_dimension_numbers<[1], [0], [0], [1], [0, 0, 1, 1], [], []>} : vector<8x32xf32>, vector<32x128xf32>, vector<8x128xf32> -> vector<8x128xf32>
    %68 = arith.addf %66, %67 : vector<8x128xf32>
    %69 = arith.negf %68 : vector<8x128xf32>
    %70 = math.exp %69 : vector<8x128xf32>
    %cst_21 = arith.constant 1.000000e+00 : f32
    %71 = vector.broadcast %cst_21 : f32 to vector<8x128xf32>
    %72 = arith.addf %71, %70 : vector<8x128xf32>
    %73 = arith.divf %71, %72 : vector<8x128xf32>
    %74 = math.tanh %68 : vector<8x128xf32>
    %75 = vector.extract_strided_slice %73 {offsets = [0, 0], sizes = [8, 32], strides = [1, 1]} : vector<8x128xf32> to vector<8x32xf32>
    %76 = vector.extract_strided_slice %73 {offsets = [0, 32], sizes = [8, 32], strides = [1, 1]} : vector<8x128xf32> to vector<8x32xf32>
    %77 = vector.extract_strided_slice %74 {offsets = [0, 64], sizes = [8, 32], strides = [1, 1]} : vector<8x128xf32> to vector<8x32xf32>
    %78 = vector.extract_strided_slice %73 {offsets = [0, 96], sizes = [8, 32], strides = [1, 1]} : vector<8x128xf32> to vector<8x32xf32>
    %79 = arith.mulf %76, %62 : vector<8x32xf32>
    %80 = arith.mulf %75, %77 : vector<8x32xf32>
    %81 = arith.addf %79, %80 : vector<8x32xf32>
    %82 = math.tanh %81 : vector<8x32xf32>
    %83 = arith.mulf %78, %82 : vector<8x32xf32>
    %84 = vector.broadcast %c2_i32 : i32 to vector<8x1xi32>
    %85 = arith.cmpi slt, %84, %7 : vector<8x1xi32>
    %86 = vector.shape_cast %85 : vector<8x1xi1> to vector<8x1xi1>
    %87 = vector.broadcast %86 : vector<8x1xi1> to vector<8x32xi1>
    %88 = arith.select %87, %83, %59 : vector<8x32xi1>, vector<8x32xf32>
    %89 = vector.shape_cast %85 : vector<8x1xi1> to vector<8x1xi1>
    %90 = vector.broadcast %89 : vector<8x1xi1> to vector<8x32xi1>
    %91 = arith.select %90, %81, %62 : vector<8x32xi1>, vector<8x32xf32>
    %c3_i32 = arith.constant 3 : i32
    %c8_i32_22 = arith.constant 8 : i32
    %92 = arith.muli %c3_i32, %c8_i32_22 : i32
    %93 = tpu.assume_multiple %92, 8 : i32
    %94 = arith.index_cast %93 : i32 to index
    %c0_23 = arith.constant 0 : index
    %95 = vector.load %arg11[%94, %c0_23] : memref<96x128xf32, #tpu.memory_space<vmem>>, vector<8x128xf32>
    %cst_24 = arith.constant dense<0.000000e+00> : vector<8x128xf32>
    %96 = tpu.matmul %88, %8, %cst_24 {dimension_numbers = #tpu.dot_dimension_numbers<[1], [0], [0], [1], [0, 0, 1, 1], [], []>} : vector<8x32xf32>, vector<32x128xf32>, vector<8x128xf32> -> vector<8x128xf32>
    %97 = arith.addf %95, %96 : vector<8x128xf32>
    %98 = arith.negf %97 : vector<8x128xf32>
    %99 = math.exp %98 : vector<8x128xf32>
    %cst_25 = arith.constant 1.000000e+00 : f32
    %100 = vector.broadcast %cst_25 : f32 to vector<8x128xf32>
    %101 = arith.addf %100, %99 : vector<8x128xf32>
    %102 = arith.divf %100, %101 : vector<8x128xf32>
    %103 = math.tanh %97 : vector<8x128xf32>
    %104 = vector.extract_strided_slice %102 {offsets = [0, 0], sizes = [8, 32], strides = [1, 1]} : vector<8x128xf32> to vector<8x32xf32>
    %105 = vector.extract_strided_slice %102 {offsets = [0, 32], sizes = [8, 32], strides = [1, 1]} : vector<8x128xf32> to vector<8x32xf32>
    %106 = vector.extract_strided_slice %103 {offsets = [0, 64], sizes = [8, 32], strides = [1, 1]} : vector<8x128xf32> to vector<8x32xf32>
    %107 = vector.extract_strided_slice %102 {offsets = [0, 96], sizes = [8, 32], strides = [1, 1]} : vector<8x128xf32> to vector<8x32xf32>
    %108 = arith.mulf %105, %91 : vector<8x32xf32>
    %109 = arith.mulf %104, %106 : vector<8x32xf32>
    %110 = arith.addf %108, %109 : vector<8x32xf32>
    %111 = math.tanh %110 : vector<8x32xf32>
    %112 = arith.mulf %107, %111 : vector<8x32xf32>
    %113 = vector.broadcast %c3_i32 : i32 to vector<8x1xi32>
    %114 = arith.cmpi slt, %113, %7 : vector<8x1xi32>
    %115 = vector.shape_cast %114 : vector<8x1xi1> to vector<8x1xi1>
    %116 = vector.broadcast %115 : vector<8x1xi1> to vector<8x32xi1>
    %117 = arith.select %116, %112, %88 : vector<8x32xi1>, vector<8x32xf32>
    %118 = vector.shape_cast %114 : vector<8x1xi1> to vector<8x1xi1>
    %119 = vector.broadcast %118 : vector<8x1xi1> to vector<8x32xi1>
    %120 = arith.select %119, %110, %91 : vector<8x32xi1>, vector<8x32xf32>
    %c4_i32 = arith.constant 4 : i32
    %c8_i32_26 = arith.constant 8 : i32
    %121 = arith.muli %c4_i32, %c8_i32_26 : i32
    %122 = tpu.assume_multiple %121, 8 : i32
    %123 = arith.index_cast %122 : i32 to index
    %c0_27 = arith.constant 0 : index
    %124 = vector.load %arg11[%123, %c0_27] : memref<96x128xf32, #tpu.memory_space<vmem>>, vector<8x128xf32>
    %cst_28 = arith.constant dense<0.000000e+00> : vector<8x128xf32>
    %125 = tpu.matmul %117, %8, %cst_28 {dimension_numbers = #tpu.dot_dimension_numbers<[1], [0], [0], [1], [0, 0, 1, 1], [], []>} : vector<8x32xf32>, vector<32x128xf32>, vector<8x128xf32> -> vector<8x128xf32>
    %126 = arith.addf %124, %125 : vector<8x128xf32>
    %127 = arith.negf %126 : vector<8x128xf32>
    %128 = math.exp %127 : vector<8x128xf32>
    %cst_29 = arith.constant 1.000000e+00 : f32
    %129 = vector.broadcast %cst_29 : f32 to vector<8x128xf32>
    %130 = arith.addf %129, %128 : vector<8x128xf32>
    %131 = arith.divf %129, %130 : vector<8x128xf32>
    %132 = math.tanh %126 : vector<8x128xf32>
    %133 = vector.extract_strided_slice %131 {offsets = [0, 0], sizes = [8, 32], strides = [1, 1]} : vector<8x128xf32> to vector<8x32xf32>
    %134 = vector.extract_strided_slice %131 {offsets = [0, 32], sizes = [8, 32], strides = [1, 1]} : vector<8x128xf32> to vector<8x32xf32>
    %135 = vector.extract_strided_slice %132 {offsets = [0, 64], sizes = [8, 32], strides = [1, 1]} : vector<8x128xf32> to vector<8x32xf32>
    %136 = vector.extract_strided_slice %131 {offsets = [0, 96], sizes = [8, 32], strides = [1, 1]} : vector<8x128xf32> to vector<8x32xf32>
    %137 = arith.mulf %134, %120 : vector<8x32xf32>
    %138 = arith.mulf %133, %135 : vector<8x32xf32>
    %139 = arith.addf %137, %138 : vector<8x32xf32>
    %140 = math.tanh %139 : vector<8x32xf32>
    %141 = arith.mulf %136, %140 : vector<8x32xf32>
    %142 = vector.broadcast %c4_i32 : i32 to vector<8x1xi32>
    %143 = arith.cmpi slt, %142, %7 : vector<8x1xi32>
    %144 = vector.shape_cast %143 : vector<8x1xi1> to vector<8x1xi1>
    %145 = vector.broadcast %144 : vector<8x1xi1> to vector<8x32xi1>
    %146 = arith.select %145, %141, %117 : vector<8x32xi1>, vector<8x32xf32>
    %147 = vector.shape_cast %143 : vector<8x1xi1> to vector<8x1xi1>
    %148 = vector.broadcast %147 : vector<8x1xi1> to vector<8x32xi1>
    %149 = arith.select %148, %139, %120 : vector<8x32xi1>, vector<8x32xf32>
    %c5_i32 = arith.constant 5 : i32
    %c8_i32_30 = arith.constant 8 : i32
    %150 = arith.muli %c5_i32, %c8_i32_30 : i32
    %151 = tpu.assume_multiple %150, 8 : i32
    %152 = arith.index_cast %151 : i32 to index
    %c0_31 = arith.constant 0 : index
    %153 = vector.load %arg11[%152, %c0_31] : memref<96x128xf32, #tpu.memory_space<vmem>>, vector<8x128xf32>
    %cst_32 = arith.constant dense<0.000000e+00> : vector<8x128xf32>
    %154 = tpu.matmul %146, %8, %cst_32 {dimension_numbers = #tpu.dot_dimension_numbers<[1], [0], [0], [1], [0, 0, 1, 1], [], []>} : vector<8x32xf32>, vector<32x128xf32>, vector<8x128xf32> -> vector<8x128xf32>
    %155 = arith.addf %153, %154 : vector<8x128xf32>
    %156 = arith.negf %155 : vector<8x128xf32>
    %157 = math.exp %156 : vector<8x128xf32>
    %cst_33 = arith.constant 1.000000e+00 : f32
    %158 = vector.broadcast %cst_33 : f32 to vector<8x128xf32>
    %159 = arith.addf %158, %157 : vector<8x128xf32>
    %160 = arith.divf %158, %159 : vector<8x128xf32>
    %161 = math.tanh %155 : vector<8x128xf32>
    %162 = vector.extract_strided_slice %160 {offsets = [0, 0], sizes = [8, 32], strides = [1, 1]} : vector<8x128xf32> to vector<8x32xf32>
    %163 = vector.extract_strided_slice %160 {offsets = [0, 32], sizes = [8, 32], strides = [1, 1]} : vector<8x128xf32> to vector<8x32xf32>
    %164 = vector.extract_strided_slice %161 {offsets = [0, 64], sizes = [8, 32], strides = [1, 1]} : vector<8x128xf32> to vector<8x32xf32>
    %165 = vector.extract_strided_slice %160 {offsets = [0, 96], sizes = [8, 32], strides = [1, 1]} : vector<8x128xf32> to vector<8x32xf32>
    %166 = arith.mulf %163, %149 : vector<8x32xf32>
    %167 = arith.mulf %162, %164 : vector<8x32xf32>
    %168 = arith.addf %166, %167 : vector<8x32xf32>
    %169 = math.tanh %168 : vector<8x32xf32>
    %170 = arith.mulf %165, %169 : vector<8x32xf32>
    %171 = vector.broadcast %c5_i32 : i32 to vector<8x1xi32>
    %172 = arith.cmpi slt, %171, %7 : vector<8x1xi32>
    %173 = vector.shape_cast %172 : vector<8x1xi1> to vector<8x1xi1>
    %174 = vector.broadcast %173 : vector<8x1xi1> to vector<8x32xi1>
    %175 = arith.select %174, %170, %146 : vector<8x32xi1>, vector<8x32xf32>
    %176 = vector.shape_cast %172 : vector<8x1xi1> to vector<8x1xi1>
    %177 = vector.broadcast %176 : vector<8x1xi1> to vector<8x32xi1>
    %178 = arith.select %177, %168, %149 : vector<8x32xi1>, vector<8x32xf32>
    %c6_i32 = arith.constant 6 : i32
    %c8_i32_34 = arith.constant 8 : i32
    %179 = arith.muli %c6_i32, %c8_i32_34 : i32
    %180 = tpu.assume_multiple %179, 8 : i32
    %181 = arith.index_cast %180 : i32 to index
    %c0_35 = arith.constant 0 : index
    %182 = vector.load %arg11[%181, %c0_35] : memref<96x128xf32, #tpu.memory_space<vmem>>, vector<8x128xf32>
    %cst_36 = arith.constant dense<0.000000e+00> : vector<8x128xf32>
    %183 = tpu.matmul %175, %8, %cst_36 {dimension_numbers = #tpu.dot_dimension_numbers<[1], [0], [0], [1], [0, 0, 1, 1], [], []>} : vector<8x32xf32>, vector<32x128xf32>, vector<8x128xf32> -> vector<8x128xf32>
    %184 = arith.addf %182, %183 : vector<8x128xf32>
    %185 = arith.negf %184 : vector<8x128xf32>
    %186 = math.exp %185 : vector<8x128xf32>
    %cst_37 = arith.constant 1.000000e+00 : f32
    %187 = vector.broadcast %cst_37 : f32 to vector<8x128xf32>
    %188 = arith.addf %187, %186 : vector<8x128xf32>
    %189 = arith.divf %187, %188 : vector<8x128xf32>
    %190 = math.tanh %184 : vector<8x128xf32>
    %191 = vector.extract_strided_slice %189 {offsets = [0, 0], sizes = [8, 32], strides = [1, 1]} : vector<8x128xf32> to vector<8x32xf32>
    %192 = vector.extract_strided_slice %189 {offsets = [0, 32], sizes = [8, 32], strides = [1, 1]} : vector<8x128xf32> to vector<8x32xf32>
    %193 = vector.extract_strided_slice %190 {offsets = [0, 64], sizes = [8, 32], strides = [1, 1]} : vector<8x128xf32> to vector<8x32xf32>
    %194 = vector.extract_strided_slice %189 {offsets = [0, 96], sizes = [8, 32], strides = [1, 1]} : vector<8x128xf32> to vector<8x32xf32>
    %195 = arith.mulf %192, %178 : vector<8x32xf32>
    %196 = arith.mulf %191, %193 : vector<8x32xf32>
    %197 = arith.addf %195, %196 : vector<8x32xf32>
    %198 = math.tanh %197 : vector<8x32xf32>
    %199 = arith.mulf %194, %198 : vector<8x32xf32>
    %200 = vector.broadcast %c6_i32 : i32 to vector<8x1xi32>
    %201 = arith.cmpi slt, %200, %7 : vector<8x1xi32>
    %202 = vector.shape_cast %201 : vector<8x1xi1> to vector<8x1xi1>
    %203 = vector.broadcast %202 : vector<8x1xi1> to vector<8x32xi1>
    %204 = arith.select %203, %199, %175 : vector<8x32xi1>, vector<8x32xf32>
    %205 = vector.shape_cast %201 : vector<8x1xi1> to vector<8x1xi1>
    %206 = vector.broadcast %205 : vector<8x1xi1> to vector<8x32xi1>
    %207 = arith.select %206, %197, %178 : vector<8x32xi1>, vector<8x32xf32>
    %c7_i32 = arith.constant 7 : i32
    %c8_i32_38 = arith.constant 8 : i32
    %208 = arith.muli %c7_i32, %c8_i32_38 : i32
    %209 = tpu.assume_multiple %208, 8 : i32
    %210 = arith.index_cast %209 : i32 to index
    %c0_39 = arith.constant 0 : index
    %211 = vector.load %arg11[%210, %c0_39] : memref<96x128xf32, #tpu.memory_space<vmem>>, vector<8x128xf32>
    %cst_40 = arith.constant dense<0.000000e+00> : vector<8x128xf32>
    %212 = tpu.matmul %204, %8, %cst_40 {dimension_numbers = #tpu.dot_dimension_numbers<[1], [0], [0], [1], [0, 0, 1, 1], [], []>} : vector<8x32xf32>, vector<32x128xf32>, vector<8x128xf32> -> vector<8x128xf32>
    %213 = arith.addf %211, %212 : vector<8x128xf32>
    %214 = arith.negf %213 : vector<8x128xf32>
    %215 = math.exp %214 : vector<8x128xf32>
    %cst_41 = arith.constant 1.000000e+00 : f32
    %216 = vector.broadcast %cst_41 : f32 to vector<8x128xf32>
    %217 = arith.addf %216, %215 : vector<8x128xf32>
    %218 = arith.divf %216, %217 : vector<8x128xf32>
    %219 = math.tanh %213 : vector<8x128xf32>
    %220 = vector.extract_strided_slice %218 {offsets = [0, 0], sizes = [8, 32], strides = [1, 1]} : vector<8x128xf32> to vector<8x32xf32>
    %221 = vector.extract_strided_slice %218 {offsets = [0, 32], sizes = [8, 32], strides = [1, 1]} : vector<8x128xf32> to vector<8x32xf32>
    %222 = vector.extract_strided_slice %219 {offsets = [0, 64], sizes = [8, 32], strides = [1, 1]} : vector<8x128xf32> to vector<8x32xf32>
    %223 = vector.extract_strided_slice %218 {offsets = [0, 96], sizes = [8, 32], strides = [1, 1]} : vector<8x128xf32> to vector<8x32xf32>
    %224 = arith.mulf %221, %207 : vector<8x32xf32>
    %225 = arith.mulf %220, %222 : vector<8x32xf32>
    %226 = arith.addf %224, %225 : vector<8x32xf32>
    %227 = math.tanh %226 : vector<8x32xf32>
    %228 = arith.mulf %223, %227 : vector<8x32xf32>
    %229 = vector.broadcast %c7_i32 : i32 to vector<8x1xi32>
    %230 = arith.cmpi slt, %229, %7 : vector<8x1xi32>
    %231 = vector.shape_cast %230 : vector<8x1xi1> to vector<8x1xi1>
    %232 = vector.broadcast %231 : vector<8x1xi1> to vector<8x32xi1>
    %233 = arith.select %232, %228, %204 : vector<8x32xi1>, vector<8x32xf32>
    %234 = vector.shape_cast %230 : vector<8x1xi1> to vector<8x1xi1>
    %235 = vector.broadcast %234 : vector<8x1xi1> to vector<8x32xi1>
    %236 = arith.select %235, %226, %207 : vector<8x32xi1>, vector<8x32xf32>
    %c8_i32_42 = arith.constant 8 : i32
    %c8_i32_43 = arith.constant 8 : i32
    %237 = arith.muli %c8_i32_42, %c8_i32_43 : i32
    %238 = tpu.assume_multiple %237, 8 : i32
    %239 = arith.index_cast %238 : i32 to index
    %c0_44 = arith.constant 0 : index
    %240 = vector.load %arg11[%239, %c0_44] : memref<96x128xf32, #tpu.memory_space<vmem>>, vector<8x128xf32>
    %cst_45 = arith.constant dense<0.000000e+00> : vector<8x128xf32>
    %241 = tpu.matmul %233, %8, %cst_45 {dimension_numbers = #tpu.dot_dimension_numbers<[1], [0], [0], [1], [0, 0, 1, 1], [], []>} : vector<8x32xf32>, vector<32x128xf32>, vector<8x128xf32> -> vector<8x128xf32>
    %242 = arith.addf %240, %241 : vector<8x128xf32>
    %243 = arith.negf %242 : vector<8x128xf32>
    %244 = math.exp %243 : vector<8x128xf32>
    %cst_46 = arith.constant 1.000000e+00 : f32
    %245 = vector.broadcast %cst_46 : f32 to vector<8x128xf32>
    %246 = arith.addf %245, %244 : vector<8x128xf32>
    %247 = arith.divf %245, %246 : vector<8x128xf32>
    %248 = math.tanh %242 : vector<8x128xf32>
    %249 = vector.extract_strided_slice %247 {offsets = [0, 0], sizes = [8, 32], strides = [1, 1]} : vector<8x128xf32> to vector<8x32xf32>
    %250 = vector.extract_strided_slice %247 {offsets = [0, 32], sizes = [8, 32], strides = [1, 1]} : vector<8x128xf32> to vector<8x32xf32>
    %251 = vector.extract_strided_slice %248 {offsets = [0, 64], sizes = [8, 32], strides = [1, 1]} : vector<8x128xf32> to vector<8x32xf32>
    %252 = vector.extract_strided_slice %247 {offsets = [0, 96], sizes = [8, 32], strides = [1, 1]} : vector<8x128xf32> to vector<8x32xf32>
    %253 = arith.mulf %250, %236 : vector<8x32xf32>
    %254 = arith.mulf %249, %251 : vector<8x32xf32>
    %255 = arith.addf %253, %254 : vector<8x32xf32>
    %256 = math.tanh %255 : vector<8x32xf32>
    %257 = arith.mulf %252, %256 : vector<8x32xf32>
    %258 = vector.broadcast %c8_i32_42 : i32 to vector<8x1xi32>
    %259 = arith.cmpi slt, %258, %7 : vector<8x1xi32>
    %260 = vector.shape_cast %259 : vector<8x1xi1> to vector<8x1xi1>
    %261 = vector.broadcast %260 : vector<8x1xi1> to vector<8x32xi1>
    %262 = arith.select %261, %257, %233 : vector<8x32xi1>, vector<8x32xf32>
    %263 = vector.shape_cast %259 : vector<8x1xi1> to vector<8x1xi1>
    %264 = vector.broadcast %263 : vector<8x1xi1> to vector<8x32xi1>
    %265 = arith.select %264, %255, %236 : vector<8x32xi1>, vector<8x32xf32>
    %c9_i32 = arith.constant 9 : i32
    %c8_i32_47 = arith.constant 8 : i32
    %266 = arith.muli %c9_i32, %c8_i32_47 : i32
    %267 = tpu.assume_multiple %266, 8 : i32
    %268 = arith.index_cast %267 : i32 to index
    %c0_48 = arith.constant 0 : index
    %269 = vector.load %arg11[%268, %c0_48] : memref<96x128xf32, #tpu.memory_space<vmem>>, vector<8x128xf32>
    %cst_49 = arith.constant dense<0.000000e+00> : vector<8x128xf32>
    %270 = tpu.matmul %262, %8, %cst_49 {dimension_numbers = #tpu.dot_dimension_numbers<[1], [0], [0], [1], [0, 0, 1, 1], [], []>} : vector<8x32xf32>, vector<32x128xf32>, vector<8x128xf32> -> vector<8x128xf32>
    %271 = arith.addf %269, %270 : vector<8x128xf32>
    %272 = arith.negf %271 : vector<8x128xf32>
    %273 = math.exp %272 : vector<8x128xf32>
    %cst_50 = arith.constant 1.000000e+00 : f32
    %274 = vector.broadcast %cst_50 : f32 to vector<8x128xf32>
    %275 = arith.addf %274, %273 : vector<8x128xf32>
    %276 = arith.divf %274, %275 : vector<8x128xf32>
    %277 = math.tanh %271 : vector<8x128xf32>
    %278 = vector.extract_strided_slice %276 {offsets = [0, 0], sizes = [8, 32], strides = [1, 1]} : vector<8x128xf32> to vector<8x32xf32>
    %279 = vector.extract_strided_slice %276 {offsets = [0, 32], sizes = [8, 32], strides = [1, 1]} : vector<8x128xf32> to vector<8x32xf32>
    %280 = vector.extract_strided_slice %277 {offsets = [0, 64], sizes = [8, 32], strides = [1, 1]} : vector<8x128xf32> to vector<8x32xf32>
    %281 = vector.extract_strided_slice %276 {offsets = [0, 96], sizes = [8, 32], strides = [1, 1]} : vector<8x128xf32> to vector<8x32xf32>
    %282 = arith.mulf %279, %265 : vector<8x32xf32>
    %283 = arith.mulf %278, %280 : vector<8x32xf32>
    %284 = arith.addf %282, %283 : vector<8x32xf32>
    %285 = math.tanh %284 : vector<8x32xf32>
    %286 = arith.mulf %281, %285 : vector<8x32xf32>
    %287 = vector.broadcast %c9_i32 : i32 to vector<8x1xi32>
    %288 = arith.cmpi slt, %287, %7 : vector<8x1xi32>
    %289 = vector.shape_cast %288 : vector<8x1xi1> to vector<8x1xi1>
    %290 = vector.broadcast %289 : vector<8x1xi1> to vector<8x32xi1>
    %291 = arith.select %290, %286, %262 : vector<8x32xi1>, vector<8x32xf32>
    %292 = vector.shape_cast %288 : vector<8x1xi1> to vector<8x1xi1>
    %293 = vector.broadcast %292 : vector<8x1xi1> to vector<8x32xi1>
    %294 = arith.select %293, %284, %265 : vector<8x32xi1>, vector<8x32xf32>
    %c10_i32 = arith.constant 10 : i32
    %c8_i32_51 = arith.constant 8 : i32
    %295 = arith.muli %c10_i32, %c8_i32_51 : i32
    %296 = tpu.assume_multiple %295, 8 : i32
    %297 = arith.index_cast %296 : i32 to index
    %c0_52 = arith.constant 0 : index
    %298 = vector.load %arg11[%297, %c0_52] : memref<96x128xf32, #tpu.memory_space<vmem>>, vector<8x128xf32>
    %cst_53 = arith.constant dense<0.000000e+00> : vector<8x128xf32>
    %299 = tpu.matmul %291, %8, %cst_53 {dimension_numbers = #tpu.dot_dimension_numbers<[1], [0], [0], [1], [0, 0, 1, 1], [], []>} : vector<8x32xf32>, vector<32x128xf32>, vector<8x128xf32> -> vector<8x128xf32>
    %300 = arith.addf %298, %299 : vector<8x128xf32>
    %301 = arith.negf %300 : vector<8x128xf32>
    %302 = math.exp %301 : vector<8x128xf32>
    %cst_54 = arith.constant 1.000000e+00 : f32
    %303 = vector.broadcast %cst_54 : f32 to vector<8x128xf32>
    %304 = arith.addf %303, %302 : vector<8x128xf32>
    %305 = arith.divf %303, %304 : vector<8x128xf32>
    %306 = math.tanh %300 : vector<8x128xf32>
    %307 = vector.extract_strided_slice %305 {offsets = [0, 0], sizes = [8, 32], strides = [1, 1]} : vector<8x128xf32> to vector<8x32xf32>
    %308 = vector.extract_strided_slice %305 {offsets = [0, 32], sizes = [8, 32], strides = [1, 1]} : vector<8x128xf32> to vector<8x32xf32>
    %309 = vector.extract_strided_slice %306 {offsets = [0, 64], sizes = [8, 32], strides = [1, 1]} : vector<8x128xf32> to vector<8x32xf32>
    %310 = vector.extract_strided_slice %305 {offsets = [0, 96], sizes = [8, 32], strides = [1, 1]} : vector<8x128xf32> to vector<8x32xf32>
    %311 = arith.mulf %308, %294 : vector<8x32xf32>
    %312 = arith.mulf %307, %309 : vector<8x32xf32>
    %313 = arith.addf %311, %312 : vector<8x32xf32>
    %314 = math.tanh %313 : vector<8x32xf32>
    %315 = arith.mulf %310, %314 : vector<8x32xf32>
    %316 = vector.broadcast %c10_i32 : i32 to vector<8x1xi32>
    %317 = arith.cmpi slt, %316, %7 : vector<8x1xi32>
    %318 = vector.shape_cast %317 : vector<8x1xi1> to vector<8x1xi1>
    %319 = vector.broadcast %318 : vector<8x1xi1> to vector<8x32xi1>
    %320 = arith.select %319, %315, %291 : vector<8x32xi1>, vector<8x32xf32>
    %321 = vector.shape_cast %317 : vector<8x1xi1> to vector<8x1xi1>
    %322 = vector.broadcast %321 : vector<8x1xi1> to vector<8x32xi1>
    %323 = arith.select %322, %313, %294 : vector<8x32xi1>, vector<8x32xf32>
    %c11_i32 = arith.constant 11 : i32
    %c8_i32_55 = arith.constant 8 : i32
    %324 = arith.muli %c11_i32, %c8_i32_55 : i32
    %325 = tpu.assume_multiple %324, 8 : i32
    %326 = arith.index_cast %325 : i32 to index
    %c0_56 = arith.constant 0 : index
    %327 = vector.load %arg11[%326, %c0_56] : memref<96x128xf32, #tpu.memory_space<vmem>>, vector<8x128xf32>
    %cst_57 = arith.constant dense<0.000000e+00> : vector<8x128xf32>
    %328 = tpu.matmul %320, %8, %cst_57 {dimension_numbers = #tpu.dot_dimension_numbers<[1], [0], [0], [1], [0, 0, 1, 1], [], []>} : vector<8x32xf32>, vector<32x128xf32>, vector<8x128xf32> -> vector<8x128xf32>
    %329 = arith.addf %327, %328 : vector<8x128xf32>
    %330 = arith.negf %329 : vector<8x128xf32>
    %331 = math.exp %330 : vector<8x128xf32>
    %cst_58 = arith.constant 1.000000e+00 : f32
    %332 = vector.broadcast %cst_58 : f32 to vector<8x128xf32>
    %333 = arith.addf %332, %331 : vector<8x128xf32>
    %334 = arith.divf %332, %333 : vector<8x128xf32>
    %335 = math.tanh %329 : vector<8x128xf32>
    %336 = vector.extract_strided_slice %334 {offsets = [0, 0], sizes = [8, 32], strides = [1, 1]} : vector<8x128xf32> to vector<8x32xf32>
    %337 = vector.extract_strided_slice %334 {offsets = [0, 32], sizes = [8, 32], strides = [1, 1]} : vector<8x128xf32> to vector<8x32xf32>
    %338 = vector.extract_strided_slice %335 {offsets = [0, 64], sizes = [8, 32], strides = [1, 1]} : vector<8x128xf32> to vector<8x32xf32>
    %339 = vector.extract_strided_slice %334 {offsets = [0, 96], sizes = [8, 32], strides = [1, 1]} : vector<8x128xf32> to vector<8x32xf32>
    %340 = arith.mulf %337, %323 : vector<8x32xf32>
    %341 = arith.mulf %336, %338 : vector<8x32xf32>
    %342 = arith.addf %340, %341 : vector<8x32xf32>
    %343 = math.tanh %342 : vector<8x32xf32>
    %344 = arith.mulf %339, %343 : vector<8x32xf32>
    %345 = vector.broadcast %c11_i32 : i32 to vector<8x1xi32>
    %346 = arith.cmpi slt, %345, %7 : vector<8x1xi32>
    %347 = vector.shape_cast %346 : vector<8x1xi1> to vector<8x1xi1>
    %348 = vector.broadcast %347 : vector<8x1xi1> to vector<8x32xi1>
    %349 = arith.select %348, %344, %320 : vector<8x32xi1>, vector<8x32xf32>
    %350 = vector.shape_cast %346 : vector<8x1xi1> to vector<8x1xi1>
    %351 = vector.broadcast %350 : vector<8x1xi1> to vector<8x32xi1>
    %352 = arith.select %351, %342, %323 : vector<8x32xi1>, vector<8x32xf32>
    %c11_i32_59 = arith.constant 11 : i32
    %c0_60 = arith.constant 0 : index
    %c0_61 = arith.constant 0 : index
    %353 = vector.load %arg6[%c0_60, %c0_61] : memref<32x32xf32, #tpu.memory_space<vmem>>, vector<32x32xf32>
    %cst_62 = arith.constant dense<0.000000e+00> : vector<8x32xf32>
    %354 = tpu.matmul %349, %353, %cst_62 {dimension_numbers = #tpu.dot_dimension_numbers<[1], [0], [0], [1], [0, 0, 1, 1], [], []>} : vector<8x32xf32>, vector<32x32xf32>, vector<8x32xf32> -> vector<8x32xf32>
    %c0_63 = arith.constant 0 : index
    %c0_64 = arith.constant 0 : index
    %355 = vector.load %arg7[%c0_63, %c0_64] : memref<1x32xf32, #tpu.memory_space<vmem>>, vector<1x32xf32>
    %356 = vector.broadcast %355 : vector<1x32xf32> to vector<8x32xf32>
    %357 = arith.addf %354, %356 : vector<8x32xf32>
    %cst_65 = arith.constant 0.000000e+00 : f32
    %358 = vector.broadcast %cst_65 : f32 to vector<8x32xf32>
    %359 = arith.maximumf %357, %358 : vector<8x32xf32>
    %c0_66 = arith.constant 0 : index
    %c0_67 = arith.constant 0 : index
    %360 = vector.load %arg8[%c0_66, %c0_67] : memref<32x128xf32, #tpu.memory_space<vmem>>, vector<32x128xf32>
    %cst_68 = arith.constant dense<0.000000e+00> : vector<8x128xf32>
    %361 = tpu.matmul %359, %360, %cst_68 {dimension_numbers = #tpu.dot_dimension_numbers<[1], [0], [0], [1], [0, 0, 1, 1], [], []>} : vector<8x32xf32>, vector<32x128xf32>, vector<8x128xf32> -> vector<8x128xf32>
    %c0_69 = arith.constant 0 : index
    %c0_70 = arith.constant 0 : index
    %362 = vector.load %arg9[%c0_69, %c0_70] : memref<1x128xf32, #tpu.memory_space<vmem>>, vector<1x128xf32>
    %363 = vector.broadcast %362 : vector<1x128xf32> to vector<8x128xf32>
    %364 = arith.addf %361, %363 : vector<8x128xf32>
    %c0_71 = arith.constant 0 : index
    %c0_72 = arith.constant 0 : index
    %365 = vector.load %arg10[%c0_71, %c0_72] : memref<8x128xf32, #tpu.memory_space<vmem>>, vector<8x128xf32>
    tpu.vector_store %arg10[%c0_71, %c0_72], %364 {strides = array<i32>} : memref<8x128xf32, #tpu.memory_space<vmem>>, vector<8x128xf32>,
    return
  }
  func.func @transform_0(%arg0: i32) -> (i32, i32) {
    %c0_i32 = arith.constant 0 : i32
    %c0_i32_0 = arith.constant 0 : i32
    %c0_i32_1 = arith.constant 0 : i32
    return %c0_i32, %c0_i32_0 : i32, i32
  }
  func.func @transform_1(%arg0: i32) -> (i32, i32) {
    %c0_i32 = arith.constant 0 : i32
    %c0_i32_0 = arith.constant 0 : i32
    %c0_i32_1 = arith.constant 0 : i32
    return %c0_i32, %c0_i32_0 : i32, i32
  }
  func.func @transform_2(%arg0: i32) -> (i32, i32) {
    %c0_i32 = arith.constant 0 : i32
    %c0_i32_0 = arith.constant 0 : i32
    %c0_i32_1 = arith.constant 0 : i32
    return %c0_i32, %c0_i32_0 : i32, i32
  }
  func.func @transform_3(%arg0: i32) -> (i32, i32) {
    %c0_i32 = arith.constant 0 : i32
    %c0_i32_0 = arith.constant 0 : i32
    %c0_i32_1 = arith.constant 0 : i32
    return %c0_i32, %c0_i32_0 : i32, i32
  }
  func.func @transform_4(%arg0: i32) -> (i32, i32) {
    %c0_i32 = arith.constant 0 : i32
    %c0_i32_0 = arith.constant 0 : i32
    %c0_i32_1 = arith.constant 0 : i32
    return %c0_i32, %c0_i32_0 : i32, i32
  }
  func.func @transform_5(%arg0: i32) -> (i32, i32) {
    %c0_i32 = arith.constant 0 : i32
    %c0_i32_0 = arith.constant 0 : i32
    %c0_i32_1 = arith.constant 0 : i32
    return %c0_i32, %c0_i32_0 : i32, i32
  }
  func.func @transform_6(%arg0: i32) -> (i32, i32) {
    %c0_i32 = arith.constant 0 : i32
    %c0_i32_0 = arith.constant 0 : i32
    %c0_i32_1 = arith.constant 0 : i32
    return %c0_i32, %c0_i32_0 : i32, i32
  }
  func.func @transform_7(%arg0: i32) -> (i32, i32) {
    %c0_i32 = arith.constant 0 : i32
    %c0_i32_0 = arith.constant 0 : i32
    %c0_i32_1 = arith.constant 0 : i32
    return %c0_i32, %c0_i32_0 : i32, i32
  }
  func.func @transform_8(%arg0: i32) -> (i32, i32) {
    %c0_i32 = arith.constant 0 : i32
    %c0_i32_0 = arith.constant 0 : i32
    %c0_i32_1 = arith.constant 0 : i32
    return %c0_i32, %c0_i32_0 : i32, i32
  }
  func.func @transform_9(%arg0: i32) -> (i32, i32) {
    %c0_i32 = arith.constant 0 : i32
    %c0_i32_0 = arith.constant 0 : i32
    %c0_i32_1 = arith.constant 0 : i32
    return %c0_i32, %c0_i32_0 : i32, i32
  }
}

</mosaic_0001>

<llo_original>
// kernel: tpu_custom_call.1
$region0: #{tpu_custom_call.1}
  #allocation0 [shape = 'u32[]', space=smem, size = 0x4, offset = 0x4, fixed_abs, tag = 'smem constant byte address 0x4 - core index']
  #allocation1 [shape = 'u32[144,128]{1,0:T(1,128)}', space=vmem, size = 0x12000, scoped, tag = 'internal scratch']
  #allocation2 [shape = 'f32[96,128]{1,0:T(8,128)}', space=vmem, size = 0xc000, scoped, tag = 'scratch operand']
  %s0 = inlined_call_operand.vmem [shape: s32[8,1], index: 0, kind: input, shape index: {}]
  %s1 = inlined_call_operand.vmem [shape: f32[96,16], index: 1, kind: input, shape index: {}]
  %s2 = inlined_call_operand.vmem [shape: f32[16,128], index: 2, kind: input, shape index: {}]
  %s3 = inlined_call_operand.vmem [shape: f32[32,128], index: 3, kind: input, shape index: {}]
  %s4 = inlined_call_operand.vmem [shape: f32[1,128], index: 4, kind: input, shape index: {}]
  %s5 = inlined_call_operand.vmem [shape: f32[32,32], index: 5, kind: input, shape index: {}]
  %s6 = inlined_call_operand.vmem [shape: f32[1,32], index: 6, kind: input, shape index: {}]
  %s7 = inlined_call_operand.vmem [shape: f32[32,128], index: 7, kind: input, shape index: {}]
  %s8 = inlined_call_operand.vmem [shape: f32[1,128], index: 8, kind: input, shape index: {}]
  %s9 = inlined_call_operand.hbm [shape: f32[8,128], index: 9, kind: output, shape index: {}]
  %s10 = sld [smem:[#allocation0]]
  $region46: #{tpu_custom_call.1} parent=0
    _
  %s12 = ssub.s32 1, %s10
  %s13 = scalar_select 0, %s12, %s10
  $region1: #{tpu_custom_call.1} parent=0
    #allocation3 [shape = 'u8[4096]{0}', space=vmem, size = 0x1000, scoped, tag = 'output window, operand 0, single buffered']
    #allocation4 [shape = 's32[1]{0}', space=sflag, size = 0x4, scoped, tag = 'scoped memory for tpu_custom_call.1']
    %14 = vsyncpa [#allocation4], 0
    // Predicated region
    $region2: #{tpu_custom_call.1} parent=1 // pred_check
      _
    $region3: #{tpu_custom_call.1} parent=1 // pred_check_branch
      %16 = sbr.rel (0) target = $region5
    $region4: #{tpu_custom_call.1} parent=1 // pred_region
      _
    $region5: #{tpu_custom_call.1} parent=1 // pred_fallthru
      _
    // Predicated region
    $region6: #{tpu_custom_call.1} parent=1 // pred_check
      _
    $region7: #{tpu_custom_call.1} parent=1 // pred_check_branch
      %18 = sbr.rel (0) target = $region9
    $region8: #{tpu_custom_call.1} parent=1 // pred_region
      _
    $region9: #{tpu_custom_call.1} parent=1 // pred_fallthru
      _
    // Predicated region
    $region10: #{tpu_custom_call.1} parent=1 // pred_check
      _
    $region11: #{tpu_custom_call.1} parent=1 // pred_check_branch
      %20 = sbr.rel (0) target = $region13
    $region12: #{tpu_custom_call.1} parent=1 // pred_region
      _
    $region13: #{tpu_custom_call.1} parent=1 // pred_fallthru
      _
    // Predicated region
    $region14: #{tpu_custom_call.1} parent=1 // pred_check
      _
    $region15: #{tpu_custom_call.1} parent=1 // pred_check_branch
      %22 = sbr.rel (0) target = $region17
    $region16: #{tpu_custom_call.1} parent=1 // pred_region
      _
    $region17: #{tpu_custom_call.1} parent=1 // pred_fallthru
      _
    // Predicated region
    $region18: #{tpu_custom_call.1} parent=1 // pred_check
      _
    $region19: #{tpu_custom_call.1} parent=1 // pred_check_branch
      %24 = sbr.rel (0) target = $region21
    $region20: #{tpu_custom_call.1} parent=1 // pred_region
      _
    $region21: #{tpu_custom_call.1} parent=1 // pred_fallthru
      _
    // Predicated region
    $region22: #{tpu_custom_call.1} parent=1 // pred_check
      _
    $region23: #{tpu_custom_call.1} parent=1 // pred_check_branch
      %26 = sbr.rel (0) target = $region25
    $region24: #{tpu_custom_call.1} parent=1 // pred_region
      _
    $region25: #{tpu_custom_call.1} parent=1 // pred_fallthru
      _
    // Predicated region
    $region26: #{tpu_custom_call.1} parent=1 // pred_check
      _
    $region27: #{tpu_custom_call.1} parent=1 // pred_check_branch
      %28 = sbr.rel (0) target = $region29
    $region28: #{tpu_custom_call.1} parent=1 // pred_region
      _
    $region29: #{tpu_custom_call.1} parent=1 // pred_fallthru
      _
    // Predicated region
    $region30: #{tpu_custom_call.1} parent=1 // pred_check
      _
    $region31: #{tpu_custom_call.1} parent=1 // pred_check_branch
      %30 = sbr.rel (0) target = $region33
    $region32: #{tpu_custom_call.1} parent=1 // pred_region
      _
    $region33: #{tpu_custom_call.1} parent=1 // pred_fallthru
      _
    // Predicated region
    $region34: #{tpu_custom_call.1} parent=1 // pred_check
      _
    $region35: #{tpu_custom_call.1} parent=1 // pred_check_branch
      %32 = sbr.rel (0) target = $region37
    $region36: #{tpu_custom_call.1} parent=1 // pred_region
      _
    $region37: #{tpu_custom_call.1} parent=1 // pred_fallthru
      _
    %v33 = vld [vmem:[%s1] sm:$0xff]
    %v34 = vld [vmem:[%s1 + $0x8] sm:$0xff]
    %v35 = vld [vmem:[%s1 + $0x10] sm:$0xff]
    %v36 = vld [vmem:[%s1 + $0x18] sm:$0xff]
    %v37 = vld [vmem:[%s1 + $0x20] sm:$0xff]
    %v38 = vld [vmem:[%s1 + $0x28] sm:$0xff]
    %v39 = vld [vmem:[%s1 + $0x30] sm:$0xff]
    %v40 = vld [vmem:[%s1 + $0x38] sm:$0xff]
    %v41 = vld [vmem:[%s1 + $0x40] sm:$0xff]
    %v42 = vld [vmem:[%s1 + $0x48] sm:$0xff]
    %v43 = vld [vmem:[%s1 + $0x50] sm:$0xff]
    %v44 = vld [vmem:[%s1 + $0x58] sm:$0xff]
    %v45 = vld [vmem:[%s2] sm:$0xff]
    %v46 = vld [vmem:[%s2 + $0x8] sm:$0xff]
    %v47 = vld [vmem:[%s4] sm:$0x1]
    %v49 = vlaneseq
    %v50 = vshrl.u32 %v49, 7
    %v51 = vsub.s32 0, %v50
    %v52 = vrot.slane %v47, %v51
    %vm54 = vcmask 130048
    %v56 = vsel %vm54, %v33, 0
    %v59 = vsel %vm54, %v34, 0
    %v62 = vsel %vm54, %v35, 0
    %v65 = vsel %vm54, %v36, 0
    %v68 = vsel %vm54, %v37, 0
    %v71 = vsel %vm54, %v38, 0
    %v74 = vsel %vm54, %v39, 0
    %v77 = vsel %vm54, %v40, 0
    %v80 = vsel %vm54, %v41, 0
    %v83 = vsel %vm54, %v42, 0
    %v86 = vsel %vm54, %v43, 0
    %v89 = vsel %vm54, %v44, 0
    %91 = vmatprep.subr.mxu0 0.0
    %92 = vmatpush1.msra.mxu0 %v45
    %93 = vmatprep.subr.mxu0 0.0
    %94 = vmatpush1.msra.mxu0 %v46
    %95 = vmatprep.subr.mxu0 0.0
    %96 = vmatpush1.msra.mxu0 0.0
    %97 = vmatprep.subr.mxu0 0.0
    %98 = vmatpush1.msra.mxu0 0.0
    %99 = vmatprep.subr.mxu0 0.0
    %100 = vmatpush1.msra.mxu0 0.0
    %101 = vmatprep.subr.mxu0 0.0
    %102 = vmatpush1.msra.mxu0 0.0
    %103 = vmatprep.subr.mxu0 0.0
    %104 = vmatpush1.msra.mxu0 0.0
    %105 = vmatprep.subr.mxu0 0.0
    %106 = vmatpush1.msra.mxu0 0.0
    %107 = vmatprep.subr.mxu0 0.0
    %108 = vmatpush1.msra.mxu0 0.0
    %109 = vmatprep.subr.mxu0 0.0
    %110 = vmatpush1.msra.mxu0 0.0
    %111 = vmatprep.subr.mxu0 0.0
    %112 = vmatpush1.msra.mxu0 0.0
    %113 = vmatprep.subr.mxu0 0.0
    %114 = vmatpush1.msra.mxu0 0.0
    %115 = vmatprep.subr.mxu0 0.0
    %116 = vmatpush1.msra.mxu0 0.0
    %117 = vmatprep.subr.mxu0 0.0
    %118 = vmatpush1.msra.mxu0 0.0
    %119 = vmatprep.subr.mxu0 0.0
    %120 = vmatpush1.msra.mxu0 0.0
    %121 = vmatprep.subr.mxu0 0.0
    %122 = vmatpush1.msra.mxu0 0.0
    %123 = vmatprep.subr.mxu0 0.0
    %124 = vmatpush1.msra.mxu0 0.0
    %125 = vmatprep.subr.mxu0 0.0
    %126 = vmatpush1.msra.mxu0 0.0
    %127 = vmatprep.subr.mxu0 0.0
    %128 = vmatpush1.msra.mxu0 0.0
    %129 = vmatprep.subr.mxu0 0.0
    %130 = vmatpush1.msra.mxu0 0.0
    %131 = vmatprep.subr.mxu0 0.0
    %132 = vmatpush1.msra.mxu0 0.0
    %133 = vmatprep.subr.mxu0 0.0
    %134 = vmatpush1.msra.mxu0 0.0
    %135 = vmatprep.subr.mxu0 0.0
    %136 = vmatpush1.msra.mxu0 0.0
    %137 = vmatprep.subr.mxu0 0.0
    %138 = vmatpush1.msra.mxu0 0.0
    %139 = vmatprep.subr.mxu0 0.0
    %140 = vmatpush1.msra.mxu0 0.0
    %141 = vmatprep.subr.mxu0 0.0
    %142 = vmatpush1.msra.mxu0 0.0
    %143 = vmatprep.subr.mxu0 0.0
    %144 = vmatpush1.msra.mxu0 0.0
    %145 = vmatprep.subr.mxu0 0.0
    %146 = vmatpush1.msra.mxu0 0.0
    %147 = vmatprep.subr.mxu0 0.0
    %148 = vmatpush1.msra.mxu0 0.0
    %149 = vmatprep.subr.mxu0 0.0
    %150 = vmatpush1.msra.mxu0 0.0
    %151 = vmatprep.subr.mxu0 0.0
    %152 = vmatpush1.msra.mxu0 0.0
    %153 = vmatprep.subr.mxu0 0.0
    %154 = vmatpush1.msra.mxu0 0.0
    %155 = vmatprep.mubr.f32.mxu0 0.0
    %156 = vmatmul.mubr.f32.gmra.mrb[0].mxu0 %v56
    %v157 = vpop.f32.mrb[0].mxu0
    %v158 = vadd.f32 %v52, %v157
    %v159 = vpop.f32.mrb[0].mxu0
    %160 = vmatprep.mubr.f32.mxu0 0.0
    %161 = vmatmul.mubr.f32.gmra.mrb[0].mxu0 %v59
    %v162 = vpop.f32.mrb[0].mxu0
    %v163 = vadd.f32 %v52, %v162
    %v164 = vpop.f32.mrb[0].mxu0
    %165 = vmatprep.mubr.f32.mxu0 0.0
    %166 = vmatmul.mubr.f32.gmra.mrb[0].mxu0 %v62
    %v167 = vpop.f32.mrb[0].mxu0
    %v168 = vadd.f32 %v52, %v167
    %v169 = vpop.f32.mrb[0].mxu0
    %170 = vmatprep.mubr.f32.mxu0 0.0
    %171 = vmatmul.mubr.f32.gmra.mrb[0].mxu0 %v65
    %v172 = vpop.f32.mrb[0].mxu0
    %v173 = vadd.f32 %v52, %v172
    %v174 = vpop.f32.mrb[0].mxu0
    %175 = vmatprep.mubr.f32.mxu0 0.0
    %176 = vmatmul.mubr.f32.gmra.mrb[0].mxu0 %v68
    %v177 = vpop.f32.mrb[0].mxu0
    %v178 = vadd.f32 %v52, %v177
    %v179 = vpop.f32.mrb[0].mxu0
    %180 = vmatprep.mubr.f32.mxu0 0.0
    %181 = vmatmul.mubr.f32.gmra.mrb[0].mxu0 %v71
    %v182 = vpop.f32.mrb[0].mxu0
    %v183 = vadd.f32 %v52, %v182
    %v184 = vpop.f32.mrb[0].mxu0
    %185 = vmatprep.mubr.f32.mxu0 0.0
    %186 = vmatmul.mubr.f32.gmra.mrb[0].mxu0 %v74
    %v187 = vpop.f32.mrb[0].mxu0
    %v188 = vadd.f32 %v52, %v187
    %v189 = vpop.f32.mrb[0].mxu0
    %190 = vmatprep.mubr.f32.mxu0 0.0
    %191 = vmatmul.mubr.f32.gmra.mrb[0].mxu0 %v77
    %v192 = vpop.f32.mrb[0].mxu0
    %v193 = vadd.f32 %v52, %v192
    %v194 = vpop.f32.mrb[0].mxu0
    %195 = vmatprep.mubr.f32.mxu0 0.0
    %196 = vmatmul.mubr.f32.gmra.mrb[0].mxu0 %v80
    %v197 = vpop.f32.mrb[0].mxu0
    %v198 = vadd.f32 %v52, %v197
    %v199 = vpop.f32.mrb[0].mxu0
    %200 = vmatprep.mubr.f32.mxu0 0.0
    %201 = vmatmul.mubr.f32.gmra.mrb[0].mxu0 %v83
    %v202 = vpop.f32.mrb[0].mxu0
    %v203 = vadd.f32 %v52, %v202
    %v204 = vpop.f32.mrb[0].mxu0
    %205 = vmatprep.mubr.f32.mxu0 0.0
    %206 = vmatmul.mubr.f32.gmra.mrb[0].mxu0 %v86
    %v207 = vpop.f32.mrb[0].mxu0
    %v208 = vadd.f32 %v52, %v207
    %v209 = vpop.f32.mrb[0].mxu0
    %210 = vmatprep.mubr.f32.mxu0 0.0
    %211 = vmatmul.mubr.f32.gmra.mrb[0].mxu0 %v89
    %v212 = vpop.f32.mrb[0].mxu0
    %v213 = vadd.f32 %v52, %v212
    %v214 = vpop.f32.mrb[0].mxu0
    %215 = vdwg.mxu0
    %216 = vst [vmem:[#allocation2] sm:$0xff] %v158
    %217 = vst [vmem:[#allocation2 + $0x8] sm:$0xff] %v163
    %218 = vst [vmem:[#allocation2 + $0x10] sm:$0xff] %v168
    %219 = vst [vmem:[#allocation2 + $0x18] sm:$0xff] %v173
    %220 = vst [vmem:[#allocation2 + $0x20] sm:$0xff] %v178
    %221 = vst [vmem:[#allocation2 + $0x28] sm:$0xff] %v183
    %222 = vst [vmem:[#allocation2 + $0x30] sm:$0xff] %v188
    %223 = vst [vmem:[#allocation2 + $0x38] sm:$0xff] %v193
    %224 = vst [vmem:[#allocation2 + $0x40] sm:$0xff] %v198
    %225 = vst [vmem:[#allocation2 + $0x48] sm:$0xff] %v203
    %226 = vst [vmem:[#allocation2 + $0x50] sm:$0xff] %v208
    %227 = vst [vmem:[#allocation2 + $0x58] sm:$0xff] %v213
    %v228 = vld [vmem:[%s0] sm:$0xff]
    %v229 = vld [vmem:[%s3] sm:$0xff]
    %v230 = vld [vmem:[%s3 + $0x8] sm:$0xff]
    %v231 = vld [vmem:[%s3 + $0x10] sm:$0xff]
    %v232 = vld [vmem:[%s3 + $0x18] sm:$0xff]
    %v233 = vld [vmem:[#allocation2] sm:$0xff]
    %v234 = vxor.u32 %v233, 2147483648
    %v235 = vmul.f32 %v234, 1.442695
    %v236 = vpow.pop %v235
    %v237 = vadd.f32 %v236, 1.0
    %v238 = vrcp.pop %v237
    %v239 = vmul.f32 1.0, %v238
    %v240 = vtanh.pop %v233
    %v241 = vmul.f32 %v239, 0.0
    %243 = vrot.lane.b32.xlu0 %v240, 64
    %v244 = vpop.permute.xlu0 %243
    %v246 = vmul.f32 %v239, %v244
    %248 = vrot.lane.b32.xlu0 %v246, 32
    %v249 = vpop.permute.xlu0 %248
    %v251 = vadd.f32 %v241, %v249
    %v252 = vtanh.pop %v251
    %254 = vrot.lane.b32.xlu0 %v252, 64
    %v255 = vpop.permute.xlu0 %254
    %v257 = vmul.f32 %v239, %v255
    %vm258 = vcmp.gt.s32.totalorder %v228, 0
    %v259 = vsel %vm258, 1, 0
    %260 = vset.pattern.permute.xlu0 0
    %261 = vperm.xlu0 %260, %v259
    %v262 = vpop.permute.xlu0 %261
    %vm263 = vcmp.eq.s32.totalorder %v262, 1
    %v264 = vsel %vm263, %v257, 0.0
    %v265 = vsel %vm263, %v251, 0.0
    %s266 = scalar_lea.vmem [#allocation2], 8
    %v267 = vld [vmem:[%s266] sm:$0xff]
    %269 = vrot.lane.b32.xlu0 %v264, 32
    %v270 = vpop.permute.xlu0 %269
    %vm271 = vcmask 261120
    %v272 = vsel %vm271, %v270, 0
    %274 = vmatprep.subr.mxu0 0.0
    %275 = vmatpush1.msra.mxu0 %v229
    %276 = vmatprep.subr.mxu0 0.0
    %277 = vmatpush1.msra.mxu0 %v230
    %278 = vmatprep.subr.mxu0 0.0
    %279 = vmatpush1.msra.mxu0 %v231
    %280 = vmatprep.subr.mxu0 0.0
    %281 = vmatpush1.msra.mxu0 %v232
    %282 = vmatprep.subr.mxu0 0.0
    %283 = vmatpush1.msra.mxu0 0.0
    %284 = vmatprep.subr.mxu0 0.0
    %285 = vmatpush1.msra.mxu0 0.0
    %286 = vmatprep.subr.mxu0 0.0
    %287 = vmatpush1.msra.mxu0 0.0
    %288 = vmatprep.subr.mxu0 0.0
    %289 = vmatpush1.msra.mxu0 0.0
    %290 = vmatprep.subr.mxu0 0.0
    %291 = vmatpush1.msra.mxu0 0.0
    %292 = vmatprep.subr.mxu0 0.0
    %293 = vmatpush1.msra.mxu0 0.0
    %294 = vmatprep.subr.mxu0 0.0
    %295 = vmatpush1.msra.mxu0 0.0
    %296 = vmatprep.subr.mxu0 0.0
    %297 = vmatpush1.msra.mxu0 0.0
    %298 = vmatprep.subr.mxu0 0.0
    %299 = vmatpush1.msra.mxu0 0.0
    %300 = vmatprep.subr.mxu0 0.0
    %301 = vmatpush1.msra.mxu0 0.0
    %302 = vmatprep.subr.mxu0 0.0
    %303 = vmatpush1.msra.mxu0 0.0
    %304 = vmatprep.subr.mxu0 0.0
    %305 = vmatpush1.msra.mxu0 0.0
    %306 = vmatprep.subr.mxu0 0.0
    %307 = vmatpush1.msra.mxu0 0.0
    %308 = vmatprep.subr.mxu0 0.0
    %309 = vmatpush1.msra.mxu0 0.0
    %310 = vmatprep.subr.mxu0 0.0
    %311 = vmatpush1.msra.mxu0 0.0
    %312 = vmatprep.subr.mxu0 0.0
    %313 = vmatpush1.msra.mxu0 0.0
    %314 = vmatprep.subr.mxu0 0.0
    %315 = vmatpush1.msra.mxu0 0.0
    %316 = vmatprep.subr.mxu0 0.0
    %317 = vmatpush1.msra.mxu0 0.0
    %318 = vmatprep.subr.mxu0 0.0
    %319 = vmatpush1.msra.mxu0 0.0
    %320 = vmatprep.subr.mxu0 0.0
    %321 = vmatpush1.msra.mxu0 0.0
    %322 = vmatprep.subr.mxu0 0.0
    %323 = vmatpush1.msra.mxu0 0.0
    %324 = vmatprep.subr.mxu0 0.0
    %325 = vmatpush1.msra.mxu0 0.0
    %326 = vmatprep.subr.mxu0 0.0
    %327 = vmatpush1.msra.mxu0 0.0
    %328 = vmatprep.subr.mxu0 0.0
    %329 = vmatpush1.msra.mxu0 0.0
    %330 = vmatprep.subr.mxu0 0.0
    %331 = vmatpush1.msra.mxu0 0.0
    %332 = vmatprep.subr.mxu0 0.0
    %333 = vmatpush1.msra.mxu0 0.0
    %334 = vmatprep.subr.mxu0 0.0
    %335 = vmatpush1.msra.mxu0 0.0
    %336 = vmatprep.subr.mxu0 0.0
    %337 = vmatpush1.msra.mxu0 0.0
    %338 = vmatprep.mubr.f32.mxu0 0.0
    %339 = vmatmul.mubr.f32.gmra.mrb[0].mxu0 %v272
    %v340 = vpop.f32.mrb[0].mxu0
    %v341 = vadd.f32 0.0, %v340
    %v342 = vpop.f32.mrb[0].mxu0
    %343 = vdwg.mxu0
    %v344 = vadd.f32 %v267, %v341
    %v345 = vxor.u32 %v344, 2147483648
    %v346 = vmul.f32 %v345, 1.442695
    %v347 = vpow.pop %v346
    %v348 = vadd.f32 %v347, 1.0
    %v349 = vrcp.pop %v348
    %v350 = vmul.f32 1.0, %v349
    %v351 = vtanh.pop %v344
    %v352 = vmul.f32 %v350, %v265
    %354 = vrot.lane.b32.xlu0 %v351, 64
    %v355 = vpop.permute.xlu0 %354
    %v357 = vmul.f32 %v350, %v355
    %359 = vrot.lane.b32.xlu0 %v357, 32
    %v360 = vpop.permute.xlu0 %359
    %v362 = vadd.f32 %v352, %v360
    %v363 = vtanh.pop %v362
    %365 = vrot.lane.b32.xlu0 %v363, 64
    %v366 = vpop.permute.xlu0 %365
    %v368 = vmul.f32 %v350, %v366
    %vm369 = vcmp.gt.s32.totalorder %v228, 1
    %v370 = vsel %vm369, 1, 0
    %371 = vset.pattern.permute.xlu0 0
    %372 = vperm.xlu0 %371, %v370
    %v373 = vpop.permute.xlu0 %372
    %vm374 = vcmp.eq.s32.totalorder %v373, 1
    %v375 = vsel %vm374, %v368, %v264
    %v376 = vsel %vm374, %v362, %v265
    %s377 = scalar_lea.vmem [#allocation2], 16
    %v378 = vld [vmem:[%s377] sm:$0xff]
    %380 = vrot.lane.b32.xlu0 %v375, 32
    %v381 = vpop.permute.xlu0 %380
    %v382 = vsel %vm271, %v381, 0
    %384 = vmatprep.subr.mxu0 0.0
    %385 = vmatpush1.msra.mxu0 %v229
    %386 = vmatprep.subr.mxu0 0.0
    %387 = vmatpush1.msra.mxu0 %v230
    %388 = vmatprep.subr.mxu0 0.0
    %389 = vmatpush1.msra.mxu0 %v231
    %390 = vmatprep.subr.mxu0 0.0
    %391 = vmatpush1.msra.mxu0 %v232
    %392 = vmatprep.subr.mxu0 0.0
    %393 = vmatpush1.msra.mxu0 0.0
    %394 = vmatprep.subr.mxu0 0.0
    %395 = vmatpush1.msra.mxu0 0.0
    %396 = vmatprep.subr.mxu0 0.0
    %397 = vmatpush1.msra.mxu0 0.0
    %398 = vmatprep.subr.mxu0 0.0
    %399 = vmatpush1.msra.mxu0 0.0
    %400 = vmatprep.subr.mxu0 0.0
    %401 = vmatpush1.msra.mxu0 0.0
    %402 = vmatprep.subr.mxu0 0.0
    %403 = vmatpush1.msra.mxu0 0.0
    %404 = vmatprep.subr.mxu0 0.0
    %405 = vmatpush1.msra.mxu0 0.0
    %406 = vmatprep.subr.mxu0 0.0
    %407 = vmatpush1.msra.mxu0 0.0
    %408 = vmatprep.subr.mxu0 0.0
    %409 = vmatpush1.msra.mxu0 0.0
    %410 = vmatprep.subr.mxu0 0.0
    %411 = vmatpush1.msra.mxu0 0.0
    %412 = vmatprep.subr.mxu0 0.0
    %413 = vmatpush1.msra.mxu0 0.0
    %414 = vmatprep.subr.mxu0 0.0
    %415 = vmatpush1.msra.mxu0 0.0
    %416 = vmatprep.subr.mxu0 0.0
    %417 = vmatpush1.msra.mxu0 0.0
    %418 = vmatprep.subr.mxu0 0.0
    %419 = vmatpush1.msra.mxu0 0.0
    %420 = vmatprep.subr.mxu0 0.0
    %421 = vmatpush1.msra.mxu0 0.0
    %422 = vmatprep.subr.mxu0 0.0
    %423 = vmatpush1.msra.mxu0 0.0
    %424 = vmatprep.subr.mxu0 0.0
    %425 = vmatpush1.msra.mxu0 0.0
    %426 = vmatprep.subr.mxu0 0.0
    %427 = vmatpush1.msra.mxu0 0.0
    %428 = vmatprep.subr.mxu0 0.0
    %429 = vmatpush1.msra.mxu0 0.0
    %430 = vmatprep.subr.mxu0 0.0
    %431 = vmatpush1.msra.mxu0 0.0
    %432 = vmatprep.subr.mxu0 0.0
    %433 = vmatpush1.msra.mxu0 0.0
    %434 = vmatprep.subr.mxu0 0.0
    %435 = vmatpush1.msra.mxu0 0.0
    %436 = vmatprep.subr.mxu0 0.0
    %437 = vmatpush1.msra.mxu0 0.0
    %438 = vmatprep.subr.mxu0 0.0
    %439 = vmatpush1.msra.mxu0 0.0
    %440 = vmatprep.subr.mxu0 0.0
    %441 = vmatpush1.msra.mxu0 0.0
    %442 = vmatprep.subr.mxu0 0.0
    %443 = vmatpush1.msra.mxu0 0.0
    %444 = vmatprep.subr.mxu0 0.0
    %445 = vmatpush1.msra.mxu0 0.0
    %446 = vmatprep.subr.mxu0 0.0
    %447 = vmatpush1.msra.mxu0 0.0
    %448 = vmatprep.mubr.f32.mxu0 0.0
    %449 = vmatmul.mubr.f32.gmra.mrb[0].mxu0 %v382
    %v450 = vpop.f32.mrb[0].mxu0
    %v451 = vadd.f32 0.0, %v450
    %v452 = vpop.f32.mrb[0].mxu0
    %453 = vdwg.mxu0
    %v454 = vadd.f32 %v378, %v451
    %v455 = vxor.u32 %v454, 2147483648
    %v456 = vmul.f32 %v455, 1.442695
    %v457 = vpow.pop %v456
    %v458 = vadd.f32 %v457, 1.0
    %v459 = vrcp.pop %v458
    %v460 = vmul.f32 1.0, %v459
    %v461 = vtanh.pop %v454
    %v462 = vmul.f32 %v460, %v376
    %464 = vrot.lane.b32.xlu0 %v461, 64
    %v465 = vpop.permute.xlu0 %464
    %v467 = vmul.f32 %v460, %v465
    %469 = vrot.lane.b32.xlu0 %v467, 32
    %v470 = vpop.permute.xlu0 %469
    %v472 = vadd.f32 %v462, %v470
    %v473 = vtanh.pop %v472
    %475 = vrot.lane.b32.xlu0 %v473, 64
    %v476 = vpop.permute.xlu0 %475
    %v478 = vmul.f32 %v460, %v476
    %vm479 = vcmp.gt.s32.totalorder %v228, 2
    %v480 = vsel %vm479, 1, 0
    %481 = vset.pattern.permute.xlu0 0
    %482 = vperm.xlu0 %481, %v480
    %v483 = vpop.permute.xlu0 %482
    %vm484 = vcmp.eq.s32.totalorder %v483, 1
    %v485 = vsel %vm484, %v478, %v375
    %v486 = vsel %vm484, %v472, %v376
    %s487 = scalar_lea.vmem [#allocation2], 24
    %v488 = vld [vmem:[%s487] sm:$0xff]
    %490 = vrot.lane.b32.xlu0 %v485, 32
    %v491 = vpop.permute.xlu0 %490
    %v492 = vsel %vm271, %v491, 0
    %494 = vmatprep.subr.mxu0 0.0
    %495 = vmatpush1.msra.mxu0 %v229
    %496 = vmatprep.subr.mxu0 0.0
    %497 = vmatpush1.msra.mxu0 %v230
    %498 = vmatprep.subr.mxu0 0.0
    %499 = vmatpush1.msra.mxu0 %v231
    %500 = vmatprep.subr.mxu0 0.0
    %501 = vmatpush1.msra.mxu0 %v232
    %502 = vmatprep.subr.mxu0 0.0
    %503 = vmatpush1.msra.mxu0 0.0
    %504 = vmatprep.subr.mxu0 0.0
    %505 = vmatpush1.msra.mxu0 0.0
    %506 = vmatprep.subr.mxu0 0.0
    %507 = vmatpush1.msra.mxu0 0.0
    %508 = vmatprep.subr.mxu0 0.0
    %509 = vmatpush1.msra.mxu0 0.0
    %510 = vmatprep.subr.mxu0 0.0
    %511 = vmatpush1.msra.mxu0 0.0
    %512 = vmatprep.subr.mxu0 0.0
    %513 = vmatpush1.msra.mxu0 0.0
    %514 = vmatprep.subr.mxu0 0.0
    %515 = vmatpush1.msra.mxu0 0.0
    %516 = vmatprep.subr.mxu0 0.0
    %517 = vmatpush1.msra.mxu0 0.0
    %518 = vmatprep.subr.mxu0 0.0
    %519 = vmatpush1.msra.mxu0 0.0
    %520 = vmatprep.subr.mxu0 0.0
    %521 = vmatpush1.msra.mxu0 0.0
    %522 = vmatprep.subr.mxu0 0.0
    %523 = vmatpush1.msra.mxu0 0.0
    %524 = vmatprep.subr.mxu0 0.0
    %525 = vmatpush1.msra.mxu0 0.0
    %526 = vmatprep.subr.mxu0 0.0
    %527 = vmatpush1.msra.mxu0 0.0
    %528 = vmatprep.subr.mxu0 0.0
    %529 = vmatpush1.msra.mxu0 0.0
    %530 = vmatprep.subr.mxu0 0.0
    %531 = vmatpush1.msra.mxu0 0.0
    %532 = vmatprep.subr.mxu0 0.0
    %533 = vmatpush1.msra.mxu0 0.0
    %534 = vmatprep.subr.mxu0 0.0
    %535 = vmatpush1.msra.mxu0 0.0
    %536 = vmatprep.subr.mxu0 0.0
    %537 = vmatpush1.msra.mxu0 0.0
    %538 = vmatprep.subr.mxu0 0.0
    %539 = vmatpush1.msra.mxu0 0.0
    %540 = vmatprep.subr.mxu0 0.0
    %541 = vmatpush1.msra.mxu0 0.0
    %542 = vmatprep.subr.mxu0 0.0
    %543 = vmatpush1.msra.mxu0 0.0
    %544 = vmatprep.subr.mxu0 0.0
    %545 = vmatpush1.msra.mxu0 0.0
    %546 = vmatprep.subr.mxu0 0.0
    %547 = vmatpush1.msra.mxu0 0.0
    %548 = vmatprep.subr.mxu0 0.0
    %549 = vmatpush1.msra.mxu0 0.0
    %550 = vmatprep.subr.mxu0 0.0
    %551 = vmatpush1.msra.mxu0 0.0
    %552 = vmatprep.subr.mxu0 0.0
    %553 = vmatpush1.msra.mxu0 0.0
    %554 = vmatprep.subr.mxu0 0.0
    %555 = vmatpush1.msra.mxu0 0.0
    %556 = vmatprep.subr.mxu0 0.0
    %557 = vmatpush1.msra.mxu0 0.0
    %558 = vmatprep.mubr.f32.mxu0 0.0
    %559 = vmatmul.mubr.f32.gmra.mrb[0].mxu0 %v492
    %v560 = vpop.f32.mrb[0].mxu0
    %v561 = vadd.f32 0.0, %v560
    %v562 = vpop.f32.mrb[0].mxu0
    %563 = vdwg.mxu0
    %v564 = vadd.f32 %v488, %v561
    %v565 = vxor.u32 %v564, 2147483648
    %v566 = vmul.f32 %v565, 1.442695
    %v567 = vpow.pop %v566
    %v568 = vadd.f32 %v567, 1.0
    %v569 = vrcp.pop %v568
    %v570 = vmul.f32 1.0, %v569
    %v571 = vtanh.pop %v564
    %v572 = vmul.f32 %v570, %v486
    %574 = vrot.lane.b32.xlu0 %v571, 64
    %v575 = vpop.permute.xlu0 %574
    %v577 = vmul.f32 %v570, %v575
    %579 = vrot.lane.b32.xlu0 %v577, 32
    %v580 = vpop.permute.xlu0 %579
    %v582 = vadd.f32 %v572, %v580
    %v583 = vtanh.pop %v582
    %585 = vrot.lane.b32.xlu0 %v583, 64
    %v586 = vpop.permute.xlu0 %585
    %v588 = vmul.f32 %v570, %v586
    %vm589 = vcmp.gt.s32.totalorder %v228, 3
    %v590 = vsel %vm589, 1, 0
    %591 = vset.pattern.permute.xlu0 0
    %592 = vperm.xlu0 %591, %v590
    %v593 = vpop.permute.xlu0 %592
    %vm594 = vcmp.eq.s32.totalorder %v593, 1
    %v595 = vsel %vm594, %v588, %v485
    %v596 = vsel %vm594, %v582, %v486
    %s597 = scalar_lea.vmem [#allocation2], 32
    %v598 = vld [vmem:[%s597] sm:$0xff]
    %600 = vrot.lane.b32.xlu0 %v595, 32
    %v601 = vpop.permute.xlu0 %600
    %v602 = vsel %vm271, %v601, 0
    %604 = vmatprep.subr.mxu0 0.0
    %605 = vmatpush1.msra.mxu0 %v229
    %606 = vmatprep.subr.mxu0 0.0
    %607 = vmatpush1.msra.mxu0 %v230
    %608 = vmatprep.subr.mxu0 0.0
    %609 = vmatpush1.msra.mxu0 %v231
    %610 = vmatprep.subr.mxu0 0.0
    %611 = vmatpush1.msra.mxu0 %v232
    %612 = vmatprep.subr.mxu0 0.0
    %613 = vmatpush1.msra.mxu0 0.0
    %614 = vmatprep.subr.mxu0 0.0
    %615 = vmatpush1.msra.mxu0 0.0
    %616 = vmatprep.subr.mxu0 0.0
    %617 = vmatpush1.msra.mxu0 0.0
    %618 = vmatprep.subr.mxu0 0.0
    %619 = vmatpush1.msra.mxu0 0.0
    %620 = vmatprep.subr.mxu0 0.0
    %621 = vmatpush1.msra.mxu0 0.0
    %622 = vmatprep.subr.mxu0 0.0
    %623 = vmatpush1.msra.mxu0 0.0
    %624 = vmatprep.subr.mxu0 0.0
    %625 = vmatpush1.msra.mxu0 0.0
    %626 = vmatprep.subr.mxu0 0.0
    %627 = vmatpush1.msra.mxu0 0.0
    %628 = vmatprep.subr.mxu0 0.0
    %629 = vmatpush1.msra.mxu0 0.0
    %630 = vmatprep.subr.mxu0 0.0
    %631 = vmatpush1.msra.mxu0 0.0
    %632 = vmatprep.subr.mxu0 0.0
    %633 = vmatpush1.msra.mxu0 0.0
    %634 = vmatprep.subr.mxu0 0.0
    %635 = vmatpush1.msra.mxu0 0.0
    %636 = vmatprep.subr.mxu0 0.0
    %637 = vmatpush1.msra.mxu0 0.0
    %638 = vmatprep.subr.mxu0 0.0
    %639 = vmatpush1.msra.mxu0 0.0
    %640 = vmatprep.subr.mxu0 0.0
    %641 = vmatpush1.msra.mxu0 0.0
    %642 = vmatprep.subr.mxu0 0.0
    %643 = vmatpush1.msra.mxu0 0.0
    %644 = vmatprep.subr.mxu0 0.0
    %645 = vmatpush1.msra.mxu0 0.0
    %646 = vmatprep.subr.mxu0 0.0
    %647 = vmatpush1.msra.mxu0 0.0
    %648 = vmatprep.subr.mxu0 0.0
    %649 = vmatpush1.msra.mxu0 0.0
    %650 = vmatprep.subr.mxu0 0.0
    %651 = vmatpush1.msra.mxu0 0.0
    %652 = vmatprep.subr.mxu0 0.0
    %653 = vmatpush1.msra.mxu0 0.0
    %654 = vmatprep.subr.mxu0 0.0
    %655 = vmatpush1.msra.mxu0 0.0
    %656 = vmatprep.subr.mxu0 0.0
    %657 = vmatpush1.msra.mxu0 0.0
    %658 = vmatprep.subr.mxu0 0.0
    %659 = vmatpush1.msra.mxu0 0.0
    %660 = vmatprep.subr.mxu0 0.0
    %661 = vmatpush1.msra.mxu0 0.0
    %662 = vmatprep.subr.mxu0 0.0
    %663 = vmatpush1.msra.mxu0 0.0
    %664 = vmatprep.subr.mxu0 0.0
    %665 = vmatpush1.msra.mxu0 0.0
    %666 = vmatprep.subr.mxu0 0.0
    %667 = vmatpush1.msra.mxu0 0.0
    %668 = vmatprep.mubr.f32.mxu0 0.0
    %669 = vmatmul.mubr.f32.gmra.mrb[0].mxu0 %v602
    %v670 = vpop.f32.mrb[0].mxu0
    %v671 = vadd.f32 0.0, %v670
    %v672 = vpop.f32.mrb[0].mxu0
    %673 = vdwg.mxu0
    %v674 = vadd.f32 %v598, %v671
    %v675 = vxor.u32 %v674, 2147483648
    %v676 = vmul.f32 %v675, 1.442695
    %v677 = vpow.pop %v676
    %v678 = vadd.f32 %v677, 1.0
    %v679 = vrcp.pop %v678
    %v680 = vmul.f32 1.0, %v679
    %v681 = vtanh.pop %v674
    %v682 = vmul.f32 %v680, %v596
    %684 = vrot.lane.b32.xlu0 %v681, 64
    %v685 = vpop.permute.xlu0 %684
    %v687 = vmul.f32 %v680, %v685
    %689 = vrot.lane.b32.xlu0 %v687, 32
    %v690 = vpop.permute.xlu0 %689
    %v692 = vadd.f32 %v682, %v690
    %v693 = vtanh.pop %v692
    %695 = vrot.lane.b32.xlu0 %v693, 64
    %v696 = vpop.permute.xlu0 %695
    %v698 = vmul.f32 %v680, %v696
    %vm699 = vcmp.gt.s32.totalorder %v228, 4
    %v700 = vsel %vm699, 1, 0
    %701 = vset.pattern.permute.xlu0 0
    %702 = vperm.xlu0 %701, %v700
    %v703 = vpop.permute.xlu0 %702
    %vm704 = vcmp.eq.s32.totalorder %v703, 1
    %v705 = vsel %vm704, %v698, %v595
    %v706 = vsel %vm704, %v692, %v596
    %s707 = scalar_lea.vmem [#allocation2], 40
    %v708 = vld [vmem:[%s707] sm:$0xff]
    %710 = vrot.lane.b32.xlu0 %v705, 32
    %v711 = vpop.permute.xlu0 %710
    %v712 = vsel %vm271, %v711, 0
    %714 = vmatprep.subr.mxu0 0.0
    %715 = vmatpush1.msra.mxu0 %v229
    %716 = vmatprep.subr.mxu0 0.0
    %717 = vmatpush1.msra.mxu0 %v230
    %718 = vmatprep.subr.mxu0 0.0
    %719 = vmatpush1.msra.mxu0 %v231
    %720 = vmatprep.subr.mxu0 0.0
    %721 = vmatpush1.msra.mxu0 %v232
    %722 = vmatprep.subr.mxu0 0.0
    %723 = vmatpush1.msra.mxu0 0.0
    %724 = vmatprep.subr.mxu0 0.0
    %725 = vmatpush1.msra.mxu0 0.0
    %726 = vmatprep.subr.mxu0 0.0
    %727 = vmatpush1.msra.mxu0 0.0
    %728 = vmatprep.subr.mxu0 0.0
    %729 = vmatpush1.msra.mxu0 0.0
    %730 = vmatprep.subr.mxu0 0.0
    %731 = vmatpush1.msra.mxu0 0.0
    %732 = vmatprep.subr.mxu0 0.0
    %733 = vmatpush1.msra.mxu0 0.0
    %734 = vmatprep.subr.mxu0 0.0
    %735 = vmatpush1.msra.mxu0 0.0
    %736 = vmatprep.subr.mxu0 0.0
    %737 = vmatpush1.msra.mxu0 0.0
    %738 = vmatprep.subr.mxu0 0.0
    %739 = vmatpush1.msra.mxu0 0.0
    %740 = vmatprep.subr.mxu0 0.0
    %741 = vmatpush1.msra.mxu0 0.0
    %742 = vmatprep.subr.mxu0 0.0
    %743 = vmatpush1.msra.mxu0 0.0
    %744 = vmatprep.subr.mxu0 0.0
    %745 = vmatpush1.msra.mxu0 0.0
    %746 = vmatprep.subr.mxu0 0.0
    %747 = vmatpush1.msra.mxu0 0.0
    %748 = vmatprep.subr.mxu0 0.0
    %749 = vmatpush1.msra.mxu0 0.0
    %750 = vmatprep.subr.mxu0 0.0
    %751 = vmatpush1.msra.mxu0 0.0
    %752 = vmatprep.subr.mxu0 0.0
    %753 = vmatpush1.msra.mxu0 0.0
    %754 = vmatprep.subr.mxu0 0.0
    %755 = vmatpush1.msra.mxu0 0.0
    %756 = vmatprep.subr.mxu0 0.0
    %757 = vmatpush1.msra.mxu0 0.0
    %758 = vmatprep.subr.mxu0 0.0
    %759 = vmatpush1.msra.mxu0 0.0
    %760 = vmatprep.subr.mxu0 0.0
    %761 = vmatpush1.msra.mxu0 0.0
    %762 = vmatprep.subr.mxu0 0.0
    %763 = vmatpush1.msra.mxu0 0.0
    %764 = vmatprep.subr.mxu0 0.0
    %765 = vmatpush1.msra.mxu0 0.0
    %766 = vmatprep.subr.mxu0 0.0
    %767 = vmatpush1.msra.mxu0 0.0
    %768 = vmatprep.subr.mxu0 0.0
    %769 = vmatpush1.msra.mxu0 0.0
    %770 = vmatprep.subr.mxu0 0.0
    %771 = vmatpush1.msra.mxu0 0.0
    %772 = vmatprep.subr.mxu0 0.0
    %773 = vmatpush1.msra.mxu0 0.0
    %774 = vmatprep.subr.mxu0 0.0
    %775 = vmatpush1.msra.mxu0 0.0
    %776 = vmatprep.subr.mxu0 0.0
    %777 = vmatpush1.msra.mxu0 0.0
    %778 = vmatprep.mubr.f32.mxu0 0.0
    %779 = vmatmul.mubr.f32.gmra.mrb[0].mxu0 %v712
    %v780 = vpop.f32.mrb[0].mxu0
    %v781 = vadd.f32 0.0, %v780
    %v782 = vpop.f32.mrb[0].mxu0
    %783 = vdwg.mxu0
    %v784 = vadd.f32 %v708, %v781
    %v785 = vxor.u32 %v784, 2147483648
    %v786 = vmul.f32 %v785, 1.442695
    %v787 = vpow.pop %v786
    %v788 = vadd.f32 %v787, 1.0
    %v789 = vrcp.pop %v788
    %v790 = vmul.f32 1.0, %v789
    %v791 = vtanh.pop %v784
    %v792 = vmul.f32 %v790, %v706
    %794 = vrot.lane.b32.xlu0 %v791, 64
    %v795 = vpop.permute.xlu0 %794
    %v797 = vmul.f32 %v790, %v795
    %799 = vrot.lane.b32.xlu0 %v797, 32
    %v800 = vpop.permute.xlu0 %799
    %v802 = vadd.f32 %v792, %v800
    %v803 = vtanh.pop %v802
    %805 = vrot.lane.b32.xlu0 %v803, 64
    %v806 = vpop.permute.xlu0 %805
    %v808 = vmul.f32 %v790, %v806
    %vm809 = vcmp.gt.s32.totalorder %v228, 5
    %v810 = vsel %vm809, 1, 0
    %811 = vset.pattern.permute.xlu0 0
    %812 = vperm.xlu0 %811, %v810
    %v813 = vpop.permute.xlu0 %812
    %vm814 = vcmp.eq.s32.totalorder %v813, 1
    %v815 = vsel %vm814, %v808, %v705
    %v816 = vsel %vm814, %v802, %v706
    %s817 = scalar_lea.vmem [#allocation2], 48
    %v818 = vld [vmem:[%s817] sm:$0xff]
    %820 = vrot.lane.b32.xlu0 %v815, 32
    %v821 = vpop.permute.xlu0 %820
    %v822 = vsel %vm271, %v821, 0
    %824 = vmatprep.subr.mxu0 0.0
    %825 = vmatpush1.msra.mxu0 %v229
    %826 = vmatprep.subr.mxu0 0.0
    %827 = vmatpush1.msra.mxu0 %v230
    %828 = vmatprep.subr.mxu0 0.0
    %829 = vmatpush1.msra.mxu0 %v231
    %830 = vmatprep.subr.mxu0 0.0
    %831 = vmatpush1.msra.mxu0 %v232
    %832 = vmatprep.subr.mxu0 0.0
    %833 = vmatpush1.msra.mxu0 0.0
    %834 = vmatprep.subr.mxu0 0.0
    %835 = vmatpush1.msra.mxu0 0.0
    %836 = vmatprep.subr.mxu0 0.0
    %837 = vmatpush1.msra.mxu0 0.0
    %838 = vmatprep.subr.mxu0 0.0
    %839 = vmatpush1.msra.mxu0 0.0
    %840 = vmatprep.subr.mxu0 0.0
    %841 = vmatpush1.msra.mxu0 0.0
    %842 = vmatprep.subr.mxu0 0.0
    %843 = vmatpush1.msra.mxu0 0.0
    %844 = vmatprep.subr.mxu0 0.0
    %845 = vmatpush1.msra.mxu0 0.0
    %846 = vmatprep.subr.mxu0 0.0
    %847 = vmatpush1.msra.mxu0 0.0
    %848 = vmatprep.subr.mxu0 0.0
    %849 = vmatpush1.msra.mxu0 0.0
    %850 = vmatprep.subr.mxu0 0.0
    %851 = vmatpush1.msra.mxu0 0.0
    %852 = vmatprep.subr.mxu0 0.0
    %853 = vmatpush1.msra.mxu0 0.0
    %854 = vmatprep.subr.mxu0 0.0
    %855 = vmatpush1.msra.mxu0 0.0
    %856 = vmatprep.subr.mxu0 0.0
    %857 = vmatpush1.msra.mxu0 0.0
    %858 = vmatprep.subr.mxu0 0.0
    %859 = vmatpush1.msra.mxu0 0.0
    %860 = vmatprep.subr.mxu0 0.0
    %861 = vmatpush1.msra.mxu0 0.0
    %862 = vmatprep.subr.mxu0 0.0
    %863 = vmatpush1.msra.mxu0 0.0
    %864 = vmatprep.subr.mxu0 0.0
    %865 = vmatpush1.msra.mxu0 0.0
    %866 = vmatprep.subr.mxu0 0.0
    %867 = vmatpush1.msra.mxu0 0.0
    %868 = vmatprep.subr.mxu0 0.0
    %869 = vmatpush1.msra.mxu0 0.0
    %870 = vmatprep.subr.mxu0 0.0
    %871 = vmatpush1.msra.mxu0 0.0
    %872 = vmatprep.subr.mxu0 0.0
    %873 = vmatpush1.msra.mxu0 0.0
    %874 = vmatprep.subr.mxu0 0.0
    %875 = vmatpush1.msra.mxu0 0.0
    %876 = vmatprep.subr.mxu0 0.0
    %877 = vmatpush1.msra.mxu0 0.0
    %878 = vmatprep.subr.mxu0 0.0
    %879 = vmatpush1.msra.mxu0 0.0
    %880 = vmatprep.subr.mxu0 0.0
    %881 = vmatpush1.msra.mxu0 0.0
    %882 = vmatprep.subr.mxu0 0.0
    %883 = vmatpush1.msra.mxu0 0.0
    %884 = vmatprep.subr.mxu0 0.0
    %885 = vmatpush1.msra.mxu0 0.0
    %886 = vmatprep.subr.mxu0 0.0
    %887 = vmatpush1.msra.mxu0 0.0
    %888 = vmatprep.mubr.f32.mxu0 0.0
    %889 = vmatmul.mubr.f32.gmra.mrb[0].mxu0 %v822
    %v890 = vpop.f32.mrb[0].mxu0
    %v891 = vadd.f32 0.0, %v890
    %v892 = vpop.f32.mrb[0].mxu0
    %893 = vdwg.mxu0
    %v894 = vadd.f32 %v818, %v891
    %v895 = vxor.u32 %v894, 2147483648
    %v896 = vmul.f32 %v895, 1.442695
    %v897 = vpow.pop %v896
    %v898 = vadd.f32 %v897, 1.0
    %v899 = vrcp.pop %v898
    %v900 = vmul.f32 1.0, %v899
    %v901 = vtanh.pop %v894
    %v902 = vmul.f32 %v900, %v816
    %904 = vrot.lane.b32.xlu0 %v901, 64
    %v905 = vpop.permute.xlu0 %904
    %v907 = vmul.f32 %v900, %v905
    %909 = vrot.lane.b32.xlu0 %v907, 32
    %v910 = vpop.permute.xlu0 %909
    %v912 = vadd.f32 %v902, %v910
    %v913 = vtanh.pop %v912
    %915 = vrot.lane.b32.xlu0 %v913, 64
    %v916 = vpop.permute.xlu0 %915
    %v918 = vmul.f32 %v900, %v916
    %vm919 = vcmp.gt.s32.totalorder %v228, 6
    %v920 = vsel %vm919, 1, 0
    %921 = vset.pattern.permute.xlu0 0
    %922 = vperm.xlu0 %921, %v920
    %v923 = vpop.permute.xlu0 %922
    %vm924 = vcmp.eq.s32.totalorder %v923, 1
    %v925 = vsel %vm924, %v918, %v815
    %v926 = vsel %vm924, %v912, %v816
    %s927 = scalar_lea.vmem [#allocation2], 56
    %v928 = vld [vmem:[%s927] sm:$0xff]
    %930 = vrot.lane.b32.xlu0 %v925, 32
    %v931 = vpop.permute.xlu0 %930
    %v932 = vsel %vm271, %v931, 0
    %934 = vmatprep.subr.mxu0 0.0
    %935 = vmatpush1.msra.mxu0 %v229
    %936 = vmatprep.subr.mxu0 0.0
    %937 = vmatpush1.msra.mxu0 %v230
    %938 = vmatprep.subr.mxu0 0.0
    %939 = vmatpush1.msra.mxu0 %v231
    %940 = vmatprep.subr.mxu0 0.0
    %941 = vmatpush1.msra.mxu0 %v232
    %942 = vmatprep.subr.mxu0 0.0
    %943 = vmatpush1.msra.mxu0 0.0
    %944 = vmatprep.subr.mxu0 0.0
    %945 = vmatpush1.msra.mxu0 0.0
    %946 = vmatprep.subr.mxu0 0.0
    %947 = vmatpush1.msra.mxu0 0.0
    %948 = vmatprep.subr.mxu0 0.0
    %949 = vmatpush1.msra.mxu0 0.0
    %950 = vmatprep.subr.mxu0 0.0
    %951 = vmatpush1.msra.mxu0 0.0
    %952 = vmatprep.subr.mxu0 0.0
    %953 = vmatpush1.msra.mxu0 0.0
    %954 = vmatprep.subr.mxu0 0.0
    %955 = vmatpush1.msra.mxu0 0.0
    %956 = vmatprep.subr.mxu0 0.0
    %957 = vmatpush1.msra.mxu0 0.0
    %958 = vmatprep.subr.mxu0 0.0
    %959 = vmatpush1.msra.mxu0 0.0
    %960 = vmatprep.subr.mxu0 0.0
    %961 = vmatpush1.msra.mxu0 0.0
    %962 = vmatprep.subr.mxu0 0.0
    %963 = vmatpush1.msra.mxu0 0.0
    %964 = vmatprep.subr.mxu0 0.0
    %965 = vmatpush1.msra.mxu0 0.0
    %966 = vmatprep.subr.mxu0 0.0
    %967 = vmatpush1.msra.mxu0 0.0
    %968 = vmatprep.subr.mxu0 0.0
    %969 = vmatpush1.msra.mxu0 0.0
    %970 = vmatprep.subr.mxu0 0.0
    %971 = vmatpush1.msra.mxu0 0.0
    %972 = vmatprep.subr.mxu0 0.0
    %973 = vmatpush1.msra.mxu0 0.0
    %974 = vmatprep.subr.mxu0 0.0
    %975 = vmatpush1.msra.mxu0 0.0
    %976 = vmatprep.subr.mxu0 0.0
    %977 = vmatpush1.msra.mxu0 0.0
    %978 = vmatprep.subr.mxu0 0.0
    %979 = vmatpush1.msra.mxu0 0.0
    %980 = vmatprep.subr.mxu0 0.0
    %981 = vmatpush1.msra.mxu0 0.0
    %982 = vmatprep.subr.mxu0 0.0
    %983 = vmatpush1.msra.mxu0 0.0
    %984 = vmatprep.subr.mxu0 0.0
    %985 = vmatpush1.msra.mxu0 0.0
    %986 = vmatprep.subr.mxu0 0.0
    %987 = vmatpush1.msra.mxu0 0.0
    %988 = vmatprep.subr.mxu0 0.0
    %989 = vmatpush1.msra.mxu0 0.0
    %990 = vmatprep.subr.mxu0 0.0
    %991 = vmatpush1.msra.mxu0 0.0
    %992 = vmatprep.subr.mxu0 0.0
    %993 = vmatpush1.msra.mxu0 0.0
    %994 = vmatprep.subr.mxu0 0.0
    %995 = vmatpush1.msra.mxu0 0.0
    %996 = vmatprep.subr.mxu0 0.0
    %997 = vmatpush1.msra.mxu0 0.0
    %998 = vmatprep.mubr.f32.mxu0 0.0
    %999 = vmatmul.mubr.f32.gmra.mrb[0].mxu0 %v932
    %v1000 = vpop.f32.mrb[0].mxu0
    %v1001 = vadd.f32 0.0, %v1000
    %v1002 = vpop.f32.mrb[0].mxu0
    %1003 = vdwg.mxu0
    %v1004 = vadd.f32 %v928, %v1001
    %v1005 = vxor.u32 %v1004, 2147483648
    %v1006 = vmul.f32 %v1005, 1.442695
    %v1007 = vpow.pop %v1006
    %v1008 = vadd.f32 %v1007, 1.0
    %v1009 = vrcp.pop %v1008
    %v1010 = vmul.f32 1.0, %v1009
    %v1011 = vtanh.pop %v1004
    %v1012 = vmul.f32 %v1010, %v926
    %1014 = vrot.lane.b32.xlu0 %v1011, 64
    %v1015 = vpop.permute.xlu0 %1014
    %v1017 = vmul.f32 %v1010, %v1015
    %1019 = vrot.lane.b32.xlu0 %v1017, 32
    %v1020 = vpop.permute.xlu0 %1019
    %v1022 = vadd.f32 %v1012, %v1020
    %v1023 = vtanh.pop %v1022
    %1025 = vrot.lane.b32.xlu0 %v1023, 64
    %v1026 = vpop.permute.xlu0 %1025
    %v1028 = vmul.f32 %v1010, %v1026
    %vm1029 = vcmp.gt.s32.totalorder %v228, 7
    %v1030 = vsel %vm1029, 1, 0
    %1031 = vset.pattern.permute.xlu0 0
    %1032 = vperm.xlu0 %1031, %v1030
    %v1033 = vpop.permute.xlu0 %1032
    %vm1034 = vcmp.eq.s32.totalorder %v1033, 1
    %v1035 = vsel %vm1034, %v1028, %v925
    %v1036 = vsel %vm1034, %v1022, %v926
    %s1037 = scalar_lea.vmem [#allocation2], 64
    %v1038 = vld [vmem:[%s1037] sm:$0xff]
    %1040 = vrot.lane.b32.xlu0 %v1035, 32
    %v1041 = vpop.permute.xlu0 %1040
    %v1042 = vsel %vm271, %v1041, 0
    %1044 = vmatprep.subr.mxu0 0.0
    %1045 = vmatpush1.msra.mxu0 %v229
    %1046 = vmatprep.subr.mxu0 0.0
    %1047 = vmatpush1.msra.mxu0 %v230
    %1048 = vmatprep.subr.mxu0 0.0
    %1049 = vmatpush1.msra.mxu0 %v231
    %1050 = vmatprep.subr.mxu0 0.0
    %1051 = vmatpush1.msra.mxu0 %v232
    %1052 = vmatprep.subr.mxu0 0.0
    %1053 = vmatpush1.msra.mxu0 0.0
    %1054 = vmatprep.subr.mxu0 0.0
    %1055 = vmatpush1.msra.mxu0 0.0
    %1056 = vmatprep.subr.mxu0 0.0
    %1057 = vmatpush1.msra.mxu0 0.0
    %1058 = vmatprep.subr.mxu0 0.0
    %1059 = vmatpush1.msra.mxu0 0.0
    %1060 = vmatprep.subr.mxu0 0.0
    %1061 = vmatpush1.msra.mxu0 0.0
    %1062 = vmatprep.subr.mxu0 0.0
    %1063 = vmatpush1.msra.mxu0 0.0
    %1064 = vmatprep.subr.mxu0 0.0
    %1065 = vmatpush1.msra.mxu0 0.0
    %1066 = vmatprep.subr.mxu0 0.0
    %1067 = vmatpush1.msra.mxu0 0.0
    %1068 = vmatprep.subr.mxu0 0.0
    %1069 = vmatpush1.msra.mxu0 0.0
    %1070 = vmatprep.subr.mxu0 0.0
    %1071 = vmatpush1.msra.mxu0 0.0
    %1072 = vmatprep.subr.mxu0 0.0
    %1073 = vmatpush1.msra.mxu0 0.0
    %1074 = vmatprep.subr.mxu0 0.0
    %1075 = vmatpush1.msra.mxu0 0.0
    %1076 = vmatprep.subr.mxu0 0.0
    %1077 = vmatpush1.msra.mxu0 0.0
    %1078 = vmatprep.subr.mxu0 0.0
    %1079 = vmatpush1.msra.mxu0 0.0
    %1080 = vmatprep.subr.mxu0 0.0
    %1081 = vmatpush1.msra.mxu0 0.0
    %1082 = vmatprep.subr.mxu0 0.0
    %1083 = vmatpush1.msra.mxu0 0.0
    %1084 = vmatprep.subr.mxu0 0.0
    %1085 = vmatpush1.msra.mxu0 0.0
    %1086 = vmatprep.subr.mxu0 0.0
    %1087 = vmatpush1.msra.mxu0 0.0
    %1088 = vmatprep.subr.mxu0 0.0
    %1089 = vmatpush1.msra.mxu0 0.0
    %1090 = vmatprep.subr.mxu0 0.0
    %1091 = vmatpush1.msra.mxu0 0.0
    %1092 = vmatprep.subr.mxu0 0.0
    %1093 = vmatpush1.msra.mxu0 0.0
    %1094 = vmatprep.subr.mxu0 0.0
    %1095 = vmatpush1.msra.mxu0 0.0
    %1096 = vmatprep.subr.mxu0 0.0
    %1097 = vmatpush1.msra.mxu0 0.0
    %1098 = vmatprep.subr.mxu0 0.0
    %1099 = vmatpush1.msra.mxu0 0.0
    %1100 = vmatprep.subr.mxu0 0.0
    %1101 = vmatpush1.msra.mxu0 0.0
    %1102 = vmatprep.subr.mxu0 0.0
    %1103 = vmatpush1.msra.mxu0 0.0
    %1104 = vmatprep.subr.mxu0 0.0
    %1105 = vmatpush1.msra.mxu0 0.0
    %1106 = vmatprep.subr.mxu0 0.0
    %1107 = vmatpush1.msra.mxu0 0.0
    %1108 = vmatprep.mubr.f32.mxu0 0.0
    %1109 = vmatmul.mubr.f32.gmra.mrb[0].mxu0 %v1042
    %v1110 = vpop.f32.mrb[0].mxu0
    %v1111 = vadd.f32 0.0, %v1110
    %v1112 = vpop.f32.mrb[0].mxu0
    %1113 = vdwg.mxu0
    %v1114 = vadd.f32 %v1038, %v1111
    %v1115 = vxor.u32 %v1114, 2147483648
    %v1116 = vmul.f32 %v1115, 1.442695
    %v1117 = vpow.pop %v1116
    %v1118 = vadd.f32 %v1117, 1.0
    %v1119 = vrcp.pop %v1118
    %v1120 = vmul.f32 1.0, %v1119
    %v1121 = vtanh.pop %v1114
    %v1122 = vmul.f32 %v1120, %v1036
    %1124 = vrot.lane.b32.xlu0 %v1121, 64
    %v1125 = vpop.permute.xlu0 %1124
    %v1127 = vmul.f32 %v1120, %v1125
    %1129 = vrot.lane.b32.xlu0 %v1127, 32
    %v1130 = vpop.permute.xlu0 %1129
    %v1132 = vadd.f32 %v1122, %v1130
    %v1133 = vtanh.pop %v1132
    %1135 = vrot.lane.b32.xlu0 %v1133, 64
    %v1136 = vpop.permute.xlu0 %1135
    %v1138 = vmul.f32 %v1120, %v1136
    %vm1139 = vcmp.gt.s32.totalorder %v228, 8
    %v1140 = vsel %vm1139, 1, 0
    %1141 = vset.pattern.permute.xlu0 0
    %1142 = vperm.xlu0 %1141, %v1140
    %v1143 = vpop.permute.xlu0 %1142
    %vm1144 = vcmp.eq.s32.totalorder %v1143, 1
    %v1145 = vsel %vm1144, %v1138, %v1035
    %v1146 = vsel %vm1144, %v1132, %v1036
    %s1147 = scalar_lea.vmem [#allocation2], 72
    %v1148 = vld [vmem:[%s1147] sm:$0xff]
    %1150 = vrot.lane.b32.xlu0 %v1145, 32
    %v1151 = vpop.permute.xlu0 %1150
    %v1152 = vsel %vm271, %v1151, 0
    %1154 = vmatprep.subr.mxu0 0.0
    %1155 = vmatpush1.msra.mxu0 %v229
    %1156 = vmatprep.subr.mxu0 0.0
    %1157 = vmatpush1.msra.mxu0 %v230
    %1158 = vmatprep.subr.mxu0 0.0
    %1159 = vmatpush1.msra.mxu0 %v231
    %1160 = vmatprep.subr.mxu0 0.0
    %1161 = vmatpush1.msra.mxu0 %v232
    %1162 = vmatprep.subr.mxu0 0.0
    %1163 = vmatpush1.msra.mxu0 0.0
    %1164 = vmatprep.subr.mxu0 0.0
    %1165 = vmatpush1.msra.mxu0 0.0
    %1166 = vmatprep.subr.mxu0 0.0
    %1167 = vmatpush1.msra.mxu0 0.0
    %1168 = vmatprep.subr.mxu0 0.0
    %1169 = vmatpush1.msra.mxu0 0.0
    %1170 = vmatprep.subr.mxu0 0.0
    %1171 = vmatpush1.msra.mxu0 0.0
    %1172 = vmatprep.subr.mxu0 0.0
    %1173 = vmatpush1.msra.mxu0 0.0
    %1174 = vmatprep.subr.mxu0 0.0
    %1175 = vmatpush1.msra.mxu0 0.0
    %1176 = vmatprep.subr.mxu0 0.0
    %1177 = vmatpush1.msra.mxu0 0.0
    %1178 = vmatprep.subr.mxu0 0.0
    %1179 = vmatpush1.msra.mxu0 0.0
    %1180 = vmatprep.subr.mxu0 0.0
    %1181 = vmatpush1.msra.mxu0 0.0
    %1182 = vmatprep.subr.mxu0 0.0
    %1183 = vmatpush1.msra.mxu0 0.0
    %1184 = vmatprep.subr.mxu0 0.0
    %1185 = vmatpush1.msra.mxu0 0.0
    %1186 = vmatprep.subr.mxu0 0.0
    %1187 = vmatpush1.msra.mxu0 0.0
    %1188 = vmatprep.subr.mxu0 0.0
    %1189 = vmatpush1.msra.mxu0 0.0
    %1190 = vmatprep.subr.mxu0 0.0
    %1191 = vmatpush1.msra.mxu0 0.0
    %1192 = vmatprep.subr.mxu0 0.0
    %1193 = vmatpush1.msra.mxu0 0.0
    %1194 = vmatprep.subr.mxu0 0.0
    %1195 = vmatpush1.msra.mxu0 0.0
    %1196 = vmatprep.subr.mxu0 0.0
    %1197 = vmatpush1.msra.mxu0 0.0
    %1198 = vmatprep.subr.mxu0 0.0
    %1199 = vmatpush1.msra.mxu0 0.0
    %1200 = vmatprep.subr.mxu0 0.0
    %1201 = vmatpush1.msra.mxu0 0.0
    %1202 = vmatprep.subr.mxu0 0.0
    %1203 = vmatpush1.msra.mxu0 0.0
    %1204 = vmatprep.subr.mxu0 0.0
    %1205 = vmatpush1.msra.mxu0 0.0
    %1206 = vmatprep.subr.mxu0 0.0
    %1207 = vmatpush1.msra.mxu0 0.0
    %1208 = vmatprep.subr.mxu0 0.0
    %1209 = vmatpush1.msra.mxu0 0.0
    %1210 = vmatprep.subr.mxu0 0.0
    %1211 = vmatpush1.msra.mxu0 0.0
    %1212 = vmatprep.subr.mxu0 0.0
    %1213 = vmatpush1.msra.mxu0 0.0
    %1214 = vmatprep.subr.mxu0 0.0
    %1215 = vmatpush1.msra.mxu0 0.0
    %1216 = vmatprep.subr.mxu0 0.0
    %1217 = vmatpush1.msra.mxu0 0.0
    %1218 = vmatprep.mubr.f32.mxu0 0.0
    %1219 = vmatmul.mubr.f32.gmra.mrb[0].mxu0 %v1152
    %v1220 = vpop.f32.mrb[0].mxu0
    %v1221 = vadd.f32 0.0, %v1220
    %v1222 = vpop.f32.mrb[0].mxu0
    %1223 = vdwg.mxu0
    %v1224 = vadd.f32 %v1148, %v1221
    %v1225 = vxor.u32 %v1224, 2147483648
    %v1226 = vmul.f32 %v1225, 1.442695
    %v1227 = vpow.pop %v1226
    %v1228 = vadd.f32 %v1227, 1.0
    %v1229 = vrcp.pop %v1228
    %v1230 = vmul.f32 1.0, %v1229
    %v1231 = vtanh.pop %v1224
    %v1232 = vmul.f32 %v1230, %v1146
    %1234 = vrot.lane.b32.xlu0 %v1231, 64
    %v1235 = vpop.permute.xlu0 %1234
    %v1237 = vmul.f32 %v1230, %v1235
    %1239 = vrot.lane.b32.xlu0 %v1237, 32
    %v1240 = vpop.permute.xlu0 %1239
    %v1242 = vadd.f32 %v1232, %v1240
    %v1243 = vtanh.pop %v1242
    %1245 = vrot.lane.b32.xlu0 %v1243, 64
    %v1246 = vpop.permute.xlu0 %1245
    %v1248 = vmul.f32 %v1230, %v1246
    %vm1249 = vcmp.gt.s32.totalorder %v228, 9
    %v1250 = vsel %vm1249, 1, 0
    %1251 = vset.pattern.permute.xlu0 0
    %1252 = vperm.xlu0 %1251, %v1250
    %v1253 = vpop.permute.xlu0 %1252
    %vm1254 = vcmp.eq.s32.totalorder %v1253, 1
    %v1255 = vsel %vm1254, %v1248, %v1145
    %v1256 = vsel %vm1254, %v1242, %v1146
    %s1257 = scalar_lea.vmem [#allocation2], 80
    %v1258 = vld [vmem:[%s1257] sm:$0xff]
    %1260 = vrot.lane.b32.xlu0 %v1255, 32
    %v1261 = vpop.permute.xlu0 %1260
    %v1262 = vsel %vm271, %v1261, 0
    %1264 = vmatprep.subr.mxu0 0.0
    %1265 = vmatpush1.msra.mxu0 %v229
    %1266 = vmatprep.subr.mxu0 0.0
    %1267 = vmatpush1.msra.mxu0 %v230
    %1268 = vmatprep.subr.mxu0 0.0
    %1269 = vmatpush1.msra.mxu0 %v231
    %1270 = vmatprep.subr.mxu0 0.0
    %1271 = vmatpush1.msra.mxu0 %v232
    %1272 = vmatprep.subr.mxu0 0.0
    %1273 = vmatpush1.msra.mxu0 0.0
    %1274 = vmatprep.subr.mxu0 0.0
    %1275 = vmatpush1.msra.mxu0 0.0
    %1276 = vmatprep.subr.mxu0 0.0
    %1277 = vmatpush1.msra.mxu0 0.0
    %1278 = vmatprep.subr.mxu0 0.0
    %1279 = vmatpush1.msra.mxu0 0.0
    %1280 = vmatprep.subr.mxu0 0.0
    %1281 = vmatpush1.msra.mxu0 0.0
    %1282 = vmatprep.subr.mxu0 0.0
    %1283 = vmatpush1.msra.mxu0 0.0
    %1284 = vmatprep.subr.mxu0 0.0
    %1285 = vmatpush1.msra.mxu0 0.0
    %1286 = vmatprep.subr.mxu0 0.0
    %1287 = vmatpush1.msra.mxu0 0.0
    %1288 = vmatprep.subr.mxu0 0.0
    %1289 = vmatpush1.msra.mxu0 0.0
    %1290 = vmatprep.subr.mxu0 0.0
    %1291 = vmatpush1.msra.mxu0 0.0
    %1292 = vmatprep.subr.mxu0 0.0
    %1293 = vmatpush1.msra.mxu0 0.0
    %1294 = vmatprep.subr.mxu0 0.0
    %1295 = vmatpush1.msra.mxu0 0.0
    %1296 = vmatprep.subr.mxu0 0.0
    %1297 = vmatpush1.msra.mxu0 0.0
    %1298 = vmatprep.subr.mxu0 0.0
    %1299 = vmatpush1.msra.mxu0 0.0
    %1300 = vmatprep.subr.mxu0 0.0
    %1301 = vmatpush1.msra.mxu0 0.0
    %1302 = vmatprep.subr.mxu0 0.0
    %1303 = vmatpush1.msra.mxu0 0.0
    %1304 = vmatprep.subr.mxu0 0.0
    %1305 = vmatpush1.msra.mxu0 0.0
    %1306 = vmatprep.subr.mxu0 0.0
    %1307 = vmatpush1.msra.mxu0 0.0
    %1308 = vmatprep.subr.mxu0 0.0
    %1309 = vmatpush1.msra.mxu0 0.0
    %1310 = vmatprep.subr.mxu0 0.0
    %1311 = vmatpush1.msra.mxu0 0.0
    %1312 = vmatprep.subr.mxu0 0.0
    %1313 = vmatpush1.msra.mxu0 0.0
    %1314 = vmatprep.subr.mxu0 0.0
    %1315 = vmatpush1.msra.mxu0 0.0
    %1316 = vmatprep.subr.mxu0 0.0
    %1317 = vmatpush1.msra.mxu0 0.0
    %1318 = vmatprep.subr.mxu0 0.0
    %1319 = vmatpush1.msra.mxu0 0.0
    %1320 = vmatprep.subr.mxu0 0.0
    %1321 = vmatpush1.msra.mxu0 0.0
    %1322 = vmatprep.subr.mxu0 0.0
    %1323 = vmatpush1.msra.mxu0 0.0
    %1324 = vmatprep.subr.mxu0 0.0
    %1325 = vmatpush1.msra.mxu0 0.0
    %1326 = vmatprep.subr.mxu0 0.0
    %1327 = vmatpush1.msra.mxu0 0.0
    %1328 = vmatprep.mubr.f32.mxu0 0.0
    %1329 = vmatmul.mubr.f32.gmra.mrb[0].mxu0 %v1262
    %v1330 = vpop.f32.mrb[0].mxu0
    %v1331 = vadd.f32 0.0, %v1330
    %v1332 = vpop.f32.mrb[0].mxu0
    %1333 = vdwg.mxu0
    %v1334 = vadd.f32 %v1258, %v1331
    %v1335 = vxor.u32 %v1334, 2147483648
    %v1336 = vmul.f32 %v1335, 1.442695
    %v1337 = vpow.pop %v1336
    %v1338 = vadd.f32 %v1337, 1.0
    %v1339 = vrcp.pop %v1338
    %v1340 = vmul.f32 1.0, %v1339
    %v1341 = vtanh.pop %v1334
    %v1342 = vmul.f32 %v1340, %v1256
    %1344 = vrot.lane.b32.xlu0 %v1341, 64
    %v1345 = vpop.permute.xlu0 %1344
    %v1347 = vmul.f32 %v1340, %v1345
    %1349 = vrot.lane.b32.xlu0 %v1347, 32
    %v1350 = vpop.permute.xlu0 %1349
    %v1352 = vadd.f32 %v1342, %v1350
    %v1353 = vtanh.pop %v1352
    %1355 = vrot.lane.b32.xlu0 %v1353, 64
    %v1356 = vpop.permute.xlu0 %1355
    %v1358 = vmul.f32 %v1340, %v1356
    %vm1359 = vcmp.gt.s32.totalorder %v228, 10
    %v1360 = vsel %vm1359, 1, 0
    %1361 = vset.pattern.permute.xlu0 0
    %1362 = vperm.xlu0 %1361, %v1360
    %v1363 = vpop.permute.xlu0 %1362
    %vm1364 = vcmp.eq.s32.totalorder %v1363, 1
    %v1365 = vsel %vm1364, %v1358, %v1255
    %v1366 = vsel %vm1364, %v1352, %v1256
    %s1367 = scalar_lea.vmem [#allocation2], 88
    %v1368 = vld [vmem:[%s1367] sm:$0xff]
    %1370 = vrot.lane.b32.xlu0 %v1365, 32
    %v1371 = vpop.permute.xlu0 %1370
    %v1372 = vsel %vm271, %v1371, 0
    %1374 = vmatprep.subr.mxu0 0.0
    %1375 = vmatpush1.msra.mxu0 %v229
    %1376 = vmatprep.subr.mxu0 0.0
    %1377 = vmatpush1.msra.mxu0 %v230
    %1378 = vmatprep.subr.mxu0 0.0
    %1379 = vmatpush1.msra.mxu0 %v231
    %1380 = vmatprep.subr.mxu0 0.0
    %1381 = vmatpush1.msra.mxu0 %v232
    %1382 = vmatprep.subr.mxu0 0.0
    %1383 = vmatpush1.msra.mxu0 0.0
    %1384 = vmatprep.subr.mxu0 0.0
    %1385 = vmatpush1.msra.mxu0 0.0
    %1386 = vmatprep.subr.mxu0 0.0
    %1387 = vmatpush1.msra.mxu0 0.0
    %1388 = vmatprep.subr.mxu0 0.0
    %1389 = vmatpush1.msra.mxu0 0.0
    %1390 = vmatprep.subr.mxu0 0.0
    %1391 = vmatpush1.msra.mxu0 0.0
    %1392 = vmatprep.subr.mxu0 0.0
    %1393 = vmatpush1.msra.mxu0 0.0
    %1394 = vmatprep.subr.mxu0 0.0
    %1395 = vmatpush1.msra.mxu0 0.0
    %1396 = vmatprep.subr.mxu0 0.0
    %1397 = vmatpush1.msra.mxu0 0.0
    %1398 = vmatprep.subr.mxu0 0.0
    %1399 = vmatpush1.msra.mxu0 0.0
    %1400 = vmatprep.subr.mxu0 0.0
    %1401 = vmatpush1.msra.mxu0 0.0
    %1402 = vmatprep.subr.mxu0 0.0
    %1403 = vmatpush1.msra.mxu0 0.0
    %1404 = vmatprep.subr.mxu0 0.0
    %1405 = vmatpush1.msra.mxu0 0.0
    %1406 = vmatprep.subr.mxu0 0.0
    %1407 = vmatpush1.msra.mxu0 0.0
    %1408 = vmatprep.subr.mxu0 0.0
    %1409 = vmatpush1.msra.mxu0 0.0
    %1410 = vmatprep.subr.mxu0 0.0
    %1411 = vmatpush1.msra.mxu0 0.0
    %1412 = vmatprep.subr.mxu0 0.0
    %1413 = vmatpush1.msra.mxu0 0.0
    %1414 = vmatprep.subr.mxu0 0.0
    %1415 = vmatpush1.msra.mxu0 0.0
    %1416 = vmatprep.subr.mxu0 0.0
    %1417 = vmatpush1.msra.mxu0 0.0
    %1418 = vmatprep.subr.mxu0 0.0
    %1419 = vmatpush1.msra.mxu0 0.0
    %1420 = vmatprep.subr.mxu0 0.0
    %1421 = vmatpush1.msra.mxu0 0.0
    %1422 = vmatprep.subr.mxu0 0.0
    %1423 = vmatpush1.msra.mxu0 0.0
    %1424 = vmatprep.subr.mxu0 0.0
    %1425 = vmatpush1.msra.mxu0 0.0
    %1426 = vmatprep.subr.mxu0 0.0
    %1427 = vmatpush1.msra.mxu0 0.0
    %1428 = vmatprep.subr.mxu0 0.0
    %1429 = vmatpush1.msra.mxu0 0.0
    %1430 = vmatprep.subr.mxu0 0.0
    %1431 = vmatpush1.msra.mxu0 0.0
    %1432 = vmatprep.subr.mxu0 0.0
    %1433 = vmatpush1.msra.mxu0 0.0
    %1434 = vmatprep.subr.mxu0 0.0
    %1435 = vmatpush1.msra.mxu0 0.0
    %1436 = vmatprep.subr.mxu0 0.0
    %1437 = vmatpush1.msra.mxu0 0.0
    %1438 = vmatprep.mubr.f32.mxu0 0.0
    %1439 = vmatmul.mubr.f32.gmra.mrb[0].mxu0 %v1372
    %v1440 = vpop.f32.mrb[0].mxu0
    %v1441 = vadd.f32 0.0, %v1440
    %v1442 = vpop.f32.mrb[0].mxu0
    %1443 = vdwg.mxu0
    %v1444 = vadd.f32 %v1368, %v1441
    %v1445 = vxor.u32 %v1444, 2147483648
    %v1446 = vmul.f32 %v1445, 1.442695
    %v1447 = vpow.pop %v1446
    %v1448 = vadd.f32 %v1447, 1.0
    %v1449 = vrcp.pop %v1448
    %v1450 = vmul.f32 1.0, %v1449
    %v1451 = vtanh.pop %v1444
    %v1452 = vmul.f32 %v1450, %v1366
    %1454 = vrot.lane.b32.xlu0 %v1451, 64
    %v1455 = vpop.permute.xlu0 %1454
    %v1457 = vmul.f32 %v1450, %v1455
    %1459 = vrot.lane.b32.xlu0 %v1457, 32
    %v1460 = vpop.permute.xlu0 %1459
    %v1462 = vadd.f32 %v1452, %v1460
    %v1463 = vtanh.pop %v1462
    %1465 = vrot.lane.b32.xlu0 %v1463, 64
    %v1466 = vpop.permute.xlu0 %1465
    %v1468 = vmul.f32 %v1450, %v1466
    %vm1469 = vcmp.gt.s32.totalorder %v228, 11
    %v1470 = vsel %vm1469, 1, 0
    %1471 = vset.pattern.permute.xlu0 0
    %1472 = vperm.xlu0 %1471, %v1470
    %v1473 = vpop.permute.xlu0 %1472
    %vm1474 = vcmp.eq.s32.totalorder %v1473, 1
    %v1475 = vsel %vm1474, %v1468, %v1365
    %v1476 = vld [vmem:[%s5] sm:$0xff]
    %v1477 = vld [vmem:[%s5 + $0x8] sm:$0xff]
    %v1478 = vld [vmem:[%s5 + $0x10] sm:$0xff]
    %v1479 = vld [vmem:[%s5 + $0x18] sm:$0xff]
    %v1480 = vld [vmem:[%s6] sm:$0x1]
    %v1482 = vlaneseq
    %v1483 = vshrl.u32 %v1482, 7
    %v1484 = vsub.s32 0, %v1483
    %v1485 = vrot.slane %v1480, %v1484
    %1488 = vrot.lane.b32.xlu0 %v1475, 32
    %v1489 = vpop.permute.xlu0 %1488
    %v1490 = vsel %vm271, %v1489, 0
    %1492 = vmatprep.subr.mxu0 0.0
    %1493 = vmatpush1.msra.mxu0 %v1476
    %1494 = vmatprep.subr.mxu0 0.0
    %1495 = vmatpush1.msra.mxu0 %v1477
    %1496 = vmatprep.subr.mxu0 0.0
    %1497 = vmatpush1.msra.mxu0 %v1478
    %1498 = vmatprep.subr.mxu0 0.0
    %1499 = vmatpush1.msra.mxu0 %v1479
    %1500 = vmatprep.subr.mxu0 0.0
    %1501 = vmatpush1.msra.mxu0 0.0
    %1502 = vmatprep.subr.mxu0 0.0
    %1503 = vmatpush1.msra.mxu0 0.0
    %1504 = vmatprep.subr.mxu0 0.0
    %1505 = vmatpush1.msra.mxu0 0.0
    %1506 = vmatprep.subr.mxu0 0.0
    %1507 = vmatpush1.msra.mxu0 0.0
    %1508 = vmatprep.subr.mxu0 0.0
    %1509 = vmatpush1.msra.mxu0 0.0
    %1510 = vmatprep.subr.mxu0 0.0
    %1511 = vmatpush1.msra.mxu0 0.0
    %1512 = vmatprep.subr.mxu0 0.0
    %1513 = vmatpush1.msra.mxu0 0.0
    %1514 = vmatprep.subr.mxu0 0.0
    %1515 = vmatpush1.msra.mxu0 0.0
    %1516 = vmatprep.subr.mxu0 0.0
    %1517 = vmatpush1.msra.mxu0 0.0
    %1518 = vmatprep.subr.mxu0 0.0
    %1519 = vmatpush1.msra.mxu0 0.0
    %1520 = vmatprep.subr.mxu0 0.0
    %1521 = vmatpush1.msra.mxu0 0.0
    %1522 = vmatprep.subr.mxu0 0.0
    %1523 = vmatpush1.msra.mxu0 0.0
    %1524 = vmatprep.subr.mxu0 0.0
    %1525 = vmatpush1.msra.mxu0 0.0
    %1526 = vmatprep.subr.mxu0 0.0
    %1527 = vmatpush1.msra.mxu0 0.0
    %1528 = vmatprep.subr.mxu0 0.0
    %1529 = vmatpush1.msra.mxu0 0.0
    %1530 = vmatprep.subr.mxu0 0.0
    %1531 = vmatpush1.msra.mxu0 0.0
    %1532 = vmatprep.subr.mxu0 0.0
    %1533 = vmatpush1.msra.mxu0 0.0
    %1534 = vmatprep.subr.mxu0 0.0
    %1535 = vmatpush1.msra.mxu0 0.0
    %1536 = vmatprep.subr.mxu0 0.0
    %1537 = vmatpush1.msra.mxu0 0.0
    %1538 = vmatprep.subr.mxu0 0.0
    %1539 = vmatpush1.msra.mxu0 0.0
    %1540 = vmatprep.subr.mxu0 0.0
    %1541 = vmatpush1.msra.mxu0 0.0
    %1542 = vmatprep.subr.mxu0 0.0
    %1543 = vmatpush1.msra.mxu0 0.0
    %1544 = vmatprep.subr.mxu0 0.0
    %1545 = vmatpush1.msra.mxu0 0.0
    %1546 = vmatprep.subr.mxu0 0.0
    %1547 = vmatpush1.msra.mxu0 0.0
    %1548 = vmatprep.subr.mxu0 0.0
    %1549 = vmatpush1.msra.mxu0 0.0
    %1550 = vmatprep.subr.mxu0 0.0
    %1551 = vmatpush1.msra.mxu0 0.0
    %1552 = vmatprep.subr.mxu0 0.0
    %1553 = vmatpush1.msra.mxu0 0.0
    %1554 = vmatprep.subr.mxu0 0.0
    %1555 = vmatpush1.msra.mxu0 0.0
    %1556 = vmatprep.mubr.f32.mxu0 0.0
    %1557 = vmatmul.mubr.f32.gmra.mrb[0].mxu0 %v1490
    %v1558 = vpop.f32.mrb[0].mxu0
    %v1559 = vadd.f32 %v1485, %v1558
    %v1560 = vpop.f32.mrb[0].mxu0
    %1561 = vdwg.mxu0
    %v1562 = vmax.f32 %v1559, 0.0
    %v1563 = vld [vmem:[%s7] sm:$0xff]
    %v1564 = vld [vmem:[%s7 + $0x8] sm:$0xff]
    %v1565 = vld [vmem:[%s7 + $0x10] sm:$0xff]
    %v1566 = vld [vmem:[%s7 + $0x18] sm:$0xff]
    %v1567 = vld [vmem:[%s8] sm:$0x1]
    %v1569 = vlaneseq
    %v1570 = vshrl.u32 %v1569, 7
    %v1571 = vsub.s32 0, %v1570
    %v1572 = vrot.slane %v1567, %v1571
    %v1575 = vsel %vm271, %v1562, 0
    %1577 = vmatprep.subr.mxu0 0.0
    %1578 = vmatpush1.msra.mxu0 %v1563
    %1579 = vmatprep.subr.mxu0 0.0
    %1580 = vmatpush1.msra.mxu0 %v1564
    %1581 = vmatprep.subr.mxu0 0.0
    %1582 = vmatpush1.msra.mxu0 %v1565
    %1583 = vmatprep.subr.mxu0 0.0
    %1584 = vmatpush1.msra.mxu0 %v1566
    %1585 = vmatprep.subr.mxu0 0.0
    %1586 = vmatpush1.msra.mxu0 0.0
    %1587 = vmatprep.subr.mxu0 0.0
    %1588 = vmatpush1.msra.mxu0 0.0
    %1589 = vmatprep.subr.mxu0 0.0
    %1590 = vmatpush1.msra.mxu0 0.0
    %1591 = vmatprep.subr.mxu0 0.0
    %1592 = vmatpush1.msra.mxu0 0.0
    %1593 = vmatprep.subr.mxu0 0.0
    %1594 = vmatpush1.msra.mxu0 0.0
    %1595 = vmatprep.subr.mxu0 0.0
    %1596 = vmatpush1.msra.mxu0 0.0
    %1597 = vmatprep.subr.mxu0 0.0
    %1598 = vmatpush1.msra.mxu0 0.0
    %1599 = vmatprep.subr.mxu0 0.0
    %1600 = vmatpush1.msra.mxu0 0.0
    %1601 = vmatprep.subr.mxu0 0.0
    %1602 = vmatpush1.msra.mxu0 0.0
    %1603 = vmatprep.subr.mxu0 0.0
    %1604 = vmatpush1.msra.mxu0 0.0
    %1605 = vmatprep.subr.mxu0 0.0
    %1606 = vmatpush1.msra.mxu0 0.0
    %1607 = vmatprep.subr.mxu0 0.0
    %1608 = vmatpush1.msra.mxu0 0.0
    %1609 = vmatprep.subr.mxu0 0.0
    %1610 = vmatpush1.msra.mxu0 0.0
    %1611 = vmatprep.subr.mxu0 0.0
    %1612 = vmatpush1.msra.mxu0 0.0
    %1613 = vmatprep.subr.mxu0 0.0
    %1614 = vmatpush1.msra.mxu0 0.0
    %1615 = vmatprep.subr.mxu0 0.0
    %1616 = vmatpush1.msra.mxu0 0.0
    %1617 = vmatprep.subr.mxu0 0.0
    %1618 = vmatpush1.msra.mxu0 0.0
    %1619 = vmatprep.subr.mxu0 0.0
    %1620 = vmatpush1.msra.mxu0 0.0
    %1621 = vmatprep.subr.mxu0 0.0
    %1622 = vmatpush1.msra.mxu0 0.0
    %1623 = vmatprep.subr.mxu0 0.0
    %1624 = vmatpush1.msra.mxu0 0.0
    %1625 = vmatprep.subr.mxu0 0.0
    %1626 = vmatpush1.msra.mxu0 0.0
    %1627 = vmatprep.subr.mxu0 0.0
    %1628 = vmatpush1.msra.mxu0 0.0
    %1629 = vmatprep.subr.mxu0 0.0
    %1630 = vmatpush1.msra.mxu0 0.0
    %1631 = vmatprep.subr.mxu0 0.0
    %1632 = vmatpush1.msra.mxu0 0.0
    %1633 = vmatprep.subr.mxu0 0.0
    %1634 = vmatpush1.msra.mxu0 0.0
    %1635 = vmatprep.subr.mxu0 0.0
    %1636 = vmatpush1.msra.mxu0 0.0
    %1637 = vmatprep.subr.mxu0 0.0
    %1638 = vmatpush1.msra.mxu0 0.0
    %1639 = vmatprep.subr.mxu0 0.0
    %1640 = vmatpush1.msra.mxu0 0.0
    %1641 = vmatprep.mubr.f32.mxu0 0.0
    %1642 = vmatmul.mubr.f32.gmra.mrb[0].mxu0 %v1575
    %v1643 = vpop.f32.mrb[0].mxu0
    %v1644 = vadd.f32 %v1572, %v1643
    %v1645 = vpop.f32.mrb[0].mxu0
    %1646 = vdwg.mxu0
    %1647 = vst [vmem:[#allocation3] sm:$0xff] %v1644
    // Predicated region
    $region38: #{tpu_custom_call.1} parent=1 // pred_check
      _
    $region39: #{tpu_custom_call.1} parent=1 // pred_check_branch
      %1649 = sbr.rel (0) target = $region41
    $region40: #{tpu_custom_call.1} parent=1 // pred_region
      %s1651 = ssub.s32 128, 128
      %1652 = vsyncadd [#allocation4], %s1651
      %s1654 = sshll.u32 [#allocation3], 4
      %s1655 = int_to_ptr.vmem [resolvable:$true] %s1654
      %1657 = dma.vmem_to_hbm [thread:$0]  %s1655, 128, %s9, [#allocation4]
    $region41: #{tpu_custom_call.1} parent=1 // pred_fallthru
      _
    // Predicated region
    $region42: #{tpu_custom_call.1} parent=1 // pred_check
      _
    $region43: #{tpu_custom_call.1} parent=1 // pred_check_branch
      %1659 = sbr.rel (0) target = $region45
    $region44: #{tpu_custom_call.1} parent=1 // pred_region
      %1660 = dma.done [#allocation4], 128
    $region45: #{tpu_custom_call.1} parent=1 // pred_fallthru
      _
    %1661 = vsyncpa [#allocation4], 1

</llo_original>
